<compile_context>
chip_gen: v7x
topology: tpu7x:2x2x1
jax: 0.10.0
libtpu: 0.0.40
codegen_flags: <defaults>
</compile_context>

<pallas_src>
import jax
import jax.numpy as jnp
from jax import lax
from jax.experimental import pallas as pl
from jax.experimental.pallas import tpu as pltpu


def _round_up(a, b):
    return (a + b - 1) // b * b


def _vmem_limit_bytes():
    """Per-generation scoped-VMEM budget with headroom.
    v7x (64 MiB physical) -> ~48 MiB; v6e/v5e (128 MiB) -> 96 MiB."""
    cap = 64 * 1024 * 1024
    try:
        cap = int(pltpu.get_tpu_info().vmem_capacity_bytes)
    except Exception:
        pass
    return min(cap * 3 // 4, 96 * 1024 * 1024)


def conv_stats_kernel(xcol_ref, w_ref, y_ref, s_ref, sq_ref):
    """Pass 1: fused 3x3-conv matmul for this M-tile; store the conv result once
    (bf16, OUT_PAD lanes) plus per-tile (sum, sum-of-squares) partials."""
    acc = jnp.dot(xcol_ref[...], w_ref[...],
                  preferred_element_type=jnp.float32)          # (tile_m, 128) f32
    y = acc[:, : y_ref.shape[1]]                               # (tile_m, OUT_PAD) f32
    y_ref[...] = y.astype(y_ref.dtype)                         # bf16 conv intermediate
    s_ref[0] = jnp.sum(y, axis=0, keepdims=True)               # (1, OUT_PAD)
    sq_ref[0] = jnp.sum(y * y, axis=0, keepdims=True)          # (1, OUT_PAD)


def bn_sigmoid_kernel(y_ref, ss_ref, o_ref):
    """Pass 2: elementwise global BatchNorm (scale/shift) + sigmoid."""
    y = y_ref[...].astype(jnp.float32)                         # (tile_m, OUT_PAD)
    scale = ss_ref[0:1, :]                                     # (1, OUT_PAD) = 1/std
    shift = ss_ref[1:2, :]                                     # (1, OUT_PAD) = -mean/std
    o_ref[...] = jax.nn.sigmoid(y * scale + shift).astype(o_ref.dtype)


def yolo_forward(x_nchw, w_oihw, *, tile_m=1024):
    """x_nchw: (N, Cin, H, W); w_oihw: (Cout, Cin, 3, 3). Returns (N, H, W, Cout) f32."""
    N, Cin, H, W = x_nchw.shape
    Cout = w_oihw.shape[0]
    M = N * H * W
    K = 9 * Cin

    out_pad = _round_up(Cout, 8)      # narrow lane width for intermediates/output
    w_pad = _round_up(Cout, 128)      # MXU-friendly RHS lane width

    # Large, 128-aligned tiles, but keep >= 2 grid steps so the "parallel" M
    # axis actually shards across both v7x TensorCores.
    tile_m = max(128, min(tile_m, _round_up(pl.cdiv(M, 2), 128)))
    num_tiles = pl.cdiv(M, tile_m)
    m_pad = num_tiles * tile_m

    # ---- glue (fused by XLA under the enclosing jit): NCHW -> NHWC, zero-pad,
    # fused-K im2col (bf16), weight packing.
    x = jnp.transpose(x_nchw, (0, 2, 3, 1)).astype(jnp.bfloat16)       # (N,H,W,Cin)
    xp = jnp.pad(x, ((0, 0), (1, 1), (1, 1), (0, 0)))                  # (N,H+2,W+2,Cin)
    cols = jnp.concatenate(
        [xp[:, dy:dy + H, dx:dx + W, :] for dy in range(3) for dx in range(3)],
        axis=-1,
    )                                                                  # (N,H,W,9*Cin)
    xcol = cols.reshape(M, K)
    xcol = jnp.pad(xcol, ((0, m_pad - M), (0, 0)))  # zero rows contribute 0 to stats

    # (Cout,Cin,3,3) -> (ky,kx,Cin,Cout) -> (9*Cin,Cout), pad Cout -> 128 lanes.
    w = jnp.transpose(w_oihw, (2, 3, 1, 0)).reshape(K, Cout)
    w = jnp.pad(w, ((0, 0), (0, w_pad - Cout))).astype(jnp.bfloat16)   # (K, w_pad)

    cparams = pltpu.CompilerParams(
        dimension_semantics=("parallel",),
        vmem_limit_bytes=_vmem_limit_bytes(),
    )

    # ---- pass 1: conv + bf16 conv intermediate + per-tile (sum, sumsq).
    y16, s_part, sq_part = pl.pallas_call(
        conv_stats_kernel,
        out_shape=(
            jax.ShapeDtypeStruct((m_pad, out_pad), jnp.bfloat16),
            jax.ShapeDtypeStruct((num_tiles, 1, out_pad), jnp.float32),
            jax.ShapeDtypeStruct((num_tiles, 1, out_pad), jnp.float32),
        ),
        grid=(num_tiles,),
        in_specs=[
            pl.BlockSpec((tile_m, K), lambda i: (i, 0)),
            pl.BlockSpec((K, w_pad), lambda i: (0, 0)),
        ],
        out_specs=(
            pl.BlockSpec((tile_m, out_pad), lambda i: (i, 0)),
            pl.BlockSpec((1, 1, out_pad), lambda i: (i, 0, 0)),
            pl.BlockSpec((1, 1, out_pad), lambda i: (i, 0, 0)),
        ),
        compiler_params=cparams,
    )(xcol, w)

    # ---- combine partials into global train-mode BatchNorm stats (tiny, f32).
    s_tot = jnp.sum(s_part[:, 0, :], axis=0)                     # (out_pad,)
    sq_tot = jnp.sum(sq_part[:, 0, :], axis=0)
    mean = s_tot / M
    var = jnp.maximum(sq_tot / M - mean * mean, 0.0)             # biased variance
    inv_std = lax.rsqrt(var + 1e-5)
    scale_shift = jnp.stack([inv_std, -mean * inv_std], axis=0)  # (2, out_pad) f32

    # ---- pass 2: elementwise normalize + sigmoid over the bf16 intermediate.
    out_flat = pl.pallas_call(
        bn_sigmoid_kernel,
        out_shape=jax.ShapeDtypeStruct((m_pad, out_pad), jnp.bfloat16),
        grid=(num_tiles,),
        in_specs=[
            pl.BlockSpec((tile_m, out_pad), lambda i: (i, 0)),
            pl.BlockSpec((2, out_pad), lambda i: (0, 0)),
        ],
        out_specs=pl.BlockSpec((tile_m, out_pad), lambda i: (i, 0)),
        compiler_params=cparams,
    )(y16, scale_shift)

    # Slice true channels, restore the module's f32 output dtype, reshape:
    # (M, out_pad) -> (N, H, W, Cout) == out_bn.permute(0, 2, 3, 1).
    return out_flat[:M, :Cout].astype(jnp.float32).reshape(N, H, W, Cout)


def reference_forward(x_nchw, w_oihw):
    """Pure-JAX f32 reference of the PyTorch forward (identity backbone)."""
    conv = lax.conv_general_dilated(
        x_nchw.astype(jnp.float32),
        w_oihw.astype(jnp.float32),
        window_strides=(1, 1),
        padding=((1, 1), (1, 1)),
        dimension_numbers=("NCHW", "OIHW", "NCHW"),
    )
    mean = jnp.mean(conv, axis=(0, 2, 3), keepdims=True)
    var = jnp.mean((conv - mean) ** 2, axis=(0, 2, 3), keepdims=True)
    out_bn = jax.nn.sigmoid((conv - mean) * lax.rsqrt(var + 1e-5))
    return jnp.transpose(out_bn, (0, 2, 3, 1))


if __name__ == "__main__":
    # Shapes consistent with the module: s=14 -> H=W=14, classes=4, b=2
    # -> Cout = b*3 + classes = 10; small Cin=8 stands in for the backbone width.
    N, Cin, H, W = 2, 8, 14, 14
    b, classes = 2, 4
    Cout = b * 3 + classes

    key = jax.random.PRNGKey(0)
    kx, kw = jax.random.split(key)

    x = jax.random.normal(kx, (N, Cin, H, W), dtype=jnp.float32)

    # Deterministic xavier_normal_ init for the 3x3 conv weight (no bias).
    fan_in, fan_out = Cin * 9, Cout * 9
    std = (2.0 / (fan_in + fan_out)) ** 0.5
    w = std * jax.random.normal(kw, (Cout, Cin, 3, 3), dtype=jnp.float32)

    fwd = jax.jit(yolo_forward, static_argnames=("tile_m",))
    out = jax.block_until_ready(fwd(x, w))
    ref = jax.block_until_ready(reference_forward(x, w))

    assert out.shape == (N, H, W, Cout), out.shape
    max_err = float(jnp.max(jnp.abs(out - ref)))
    assert max_err < 2e-2, max_err  # bf16 matmul inputs / bf16 intermediate vs f32 ref

    print("KERNEL_OK")
</pallas_src>

<mosaic_0001>
module attributes {stable_mosaic.version = 11 : i64} {
  func.func @conv_stats_kernel(%arg0: i32, %arg1: memref<256x72xbf16, #tpu.memory_space<vmem>>, %arg2: memref<72x128xbf16, #tpu.memory_space<vmem>>, %arg3: memref<256x16xbf16, #tpu.memory_space<vmem>>, %arg4: memref<1x1x16xf32, #tpu.memory_space<vmem>>, %arg5: memref<1x1x16xf32, #tpu.memory_space<vmem>>) attributes {dimension_semantics = [#tpu.dimension_semantics<parallel>], iteration_bounds = array<i64: 2>, scalar_prefetch = 0 : i64, scratch_operands = 0 : i64, tpu.core_type = #tpu.core_type<tc>, window_params = [{transform_indices = @transform_0, window_bounds = array<i64: 256, 72>}, {pipeline_mode = #tpu.pipeline_mode<synchronous>, transform_indices = @transform_1, window_bounds = array<i64: 72, 128>}, {transform_indices = @transform_2, window_bounds = array<i64: 256, 16>}, {transform_indices = @transform_3, window_bounds = array<i64: 1, 1, 16>}, {transform_indices = @transform_4, window_bounds = array<i64: 1, 1, 16>}]} {
    %c0 = arith.constant 0 : index
    %c0_0 = arith.constant 0 : index
    %0 = vector.load %arg1[%c0, %c0_0] : memref<256x72xbf16, #tpu.memory_space<vmem>>, vector<256x72xbf16>
    %c0_1 = arith.constant 0 : index
    %c0_2 = arith.constant 0 : index
    %1 = vector.load %arg2[%c0_1, %c0_2] : memref<72x128xbf16, #tpu.memory_space<vmem>>, vector<72x128xbf16>
    %cst = arith.constant dense<0.000000e+00> : vector<256x128xf32>
    %2 = tpu.matmul %0, %1, %cst {dimension_numbers = #tpu.dot_dimension_numbers<[1], [0], [0], [1], [0, 0, 1, 1], [], []>} : vector<256x72xbf16>, vector<72x128xbf16>, vector<256x128xf32> -> vector<256x128xf32>
    %3 = vector.extract_strided_slice %2 {offsets = [0, 0], sizes = [256, 16], strides = [1, 1]} : vector<256x128xf32> to vector<256x16xf32>
    %4 = arith.truncf %3 : vector<256x16xf32> to vector<256x16xbf16>
    %c0_3 = arith.constant 0 : index
    %c0_4 = arith.constant 0 : index
    %5 = vector.load %arg3[%c0_3, %c0_4] : memref<256x16xbf16, #tpu.memory_space<vmem>>, vector<256x16xbf16>
    tpu.vector_store %arg3[%c0_3, %c0_4], %4 {strides = array<i32>} : memref<256x16xbf16, #tpu.memory_space<vmem>>, vector<256x16xbf16>,
    %cst_5 = arith.constant dense<0.000000e+00> : vector<16xf32>
    %6 = vector.multi_reduction <add>, %3, %cst_5 [0] : vector<256x16xf32> to vector<16xf32>
    %7 = vector.shape_cast %6 : vector<16xf32> to vector<1x16xf32>
    %c0_6 = arith.constant 0 : index
    %c0_7 = arith.constant 0 : index
    %c0_8 = arith.constant 0 : index
    %8 = vector.load %arg4[%c0_6, %c0_7, %c0_8] : memref<1x1x16xf32, #tpu.memory_space<vmem>>, vector<1x1x16xf32>
    %9 = vector.shape_cast %8 : vector<1x1x16xf32> to vector<1x16xf32>
    %10 = vector.shape_cast %7 : vector<1x16xf32> to vector<1x1x16xf32>
    tpu.vector_store %arg4[%c0_6, %c0_7, %c0_8], %10 {strides = array<i32>} : memref<1x1x16xf32, #tpu.memory_space<vmem>>, vector<1x1x16xf32>,
    %11 = arith.mulf %3, %3 : vector<256x16xf32>
    %cst_9 = arith.constant dense<0.000000e+00> : vector<16xf32>
    %12 = vector.multi_reduction <add>, %11, %cst_9 [0] : vector<256x16xf32> to vector<16xf32>
    %13 = vector.shape_cast %12 : vector<16xf32> to vector<1x16xf32>
    %c0_10 = arith.constant 0 : index
    %c0_11 = arith.constant 0 : index
    %c0_12 = arith.constant 0 : index
    %14 = vector.load %arg5[%c0_10, %c0_11, %c0_12] : memref<1x1x16xf32, #tpu.memory_space<vmem>>, vector<1x1x16xf32>
    %15 = vector.shape_cast %14 : vector<1x1x16xf32> to vector<1x16xf32>
    %16 = vector.shape_cast %13 : vector<1x16xf32> to vector<1x1x16xf32>
    tpu.vector_store %arg5[%c0_10, %c0_11, %c0_12], %16 {strides = array<i32>} : memref<1x1x16xf32, #tpu.memory_space<vmem>>, vector<1x1x16xf32>,
    return
  }
  func.func @transform_0(%arg0: i32) -> (i32, i32) {
    %c0_i32 = arith.constant 0 : i32
    %c0_i32_0 = arith.constant 0 : i32
    return %arg0, %c0_i32 : i32, i32
  }
  func.func @transform_1(%arg0: i32) -> (i32, i32) {
    %c0_i32 = arith.constant 0 : i32
    %c0_i32_0 = arith.constant 0 : i32
    %c0_i32_1 = arith.constant 0 : i32
    return %c0_i32, %c0_i32_0 : i32, i32
  }
  func.func @transform_2(%arg0: i32) -> (i32, i32) {
    %c0_i32 = arith.constant 0 : i32
    %c0_i32_0 = arith.constant 0 : i32
    return %arg0, %c0_i32 : i32, i32
  }
  func.func @transform_3(%arg0: i32) -> (i32, i32, i32) {
    %c0_i32 = arith.constant 0 : i32
    %c0_i32_0 = arith.constant 0 : i32
    %c0_i32_1 = arith.constant 0 : i32
    return %arg0, %c0_i32, %c0_i32_0 : i32, i32, i32
  }
  func.func @transform_4(%arg0: i32) -> (i32, i32, i32) {
    %c0_i32 = arith.constant 0 : i32
    %c0_i32_0 = arith.constant 0 : i32
    %c0_i32_1 = arith.constant 0 : i32
    return %arg0, %c0_i32, %c0_i32_0 : i32, i32, i32
  }
}

module attributes {stable_mosaic.version = 11 : i64} {
  func.func @bn_sigmoid_kernel(%arg0: i32, %arg1: memref<256x16xbf16, #tpu.memory_space<vmem>>, %arg2: memref<2x16xf32, #tpu.memory_space<vmem>>, %arg3: memref<256x16xbf16, #tpu.memory_space<vmem>>) attributes {dimension_semantics = [#tpu.dimension_semantics<parallel>], iteration_bounds = array<i64: 2>, scalar_prefetch = 0 : i64, scratch_operands = 0 : i64, tpu.core_type = #tpu.core_type<tc>, window_params = [{transform_indices = @transform_0, window_bounds = array<i64: 256, 16>}, {pipeline_mode = #tpu.pipeline_mode<synchronous>, transform_indices = @transform_1, window_bounds = array<i64: 2, 16>}, {transform_indices = @transform_2, window_bounds = array<i64: 256, 16>}]} {
    %c0 = arith.constant 0 : index
    %c0_0 = arith.constant 0 : index
    %0 = vector.load %arg1[%c0, %c0_0] : memref<256x16xbf16, #tpu.memory_space<vmem>>, vector<256x16xbf16>
    %1 = arith.extf %0 : vector<256x16xbf16> to vector<256x16xf32>
    %c0_1 = arith.constant 0 : index
    %c0_2 = arith.constant 0 : index
    %2 = vector.load %arg2[%c0_1, %c0_2] : memref<2x16xf32, #tpu.memory_space<vmem>>, vector<1x16xf32>
    %c1 = arith.constant 1 : index
    %c0_3 = arith.constant 0 : index
    %3 = vector.load %arg2[%c1, %c0_3] : memref<2x16xf32, #tpu.memory_space<vmem>>, vector<1x16xf32>
    %4 = vector.broadcast %2 : vector<1x16xf32> to vector<256x16xf32>
    %5 = arith.mulf %1, %4 : vector<256x16xf32>
    %6 = vector.broadcast %3 : vector<1x16xf32> to vector<256x16xf32>
    %7 = arith.addf %5, %6 : vector<256x16xf32>
    %8 = arith.negf %7 : vector<256x16xf32>
    %9 = math.exp %8 : vector<256x16xf32>
    %cst = arith.constant 1.000000e+00 : f32
    %10 = vector.broadcast %cst : f32 to vector<256x16xf32>
    %11 = arith.addf %10, %9 : vector<256x16xf32>
    %12 = arith.divf %10, %11 : vector<256x16xf32>
    %13 = arith.truncf %12 : vector<256x16xf32> to vector<256x16xbf16>
    %c0_4 = arith.constant 0 : index
    %c0_5 = arith.constant 0 : index
    %14 = vector.load %arg3[%c0_4, %c0_5] : memref<256x16xbf16, #tpu.memory_space<vmem>>, vector<256x16xbf16>
    tpu.vector_store %arg3[%c0_4, %c0_5], %13 {strides = array<i32>} : memref<256x16xbf16, #tpu.memory_space<vmem>>, vector<256x16xbf16>,
    return
  }
  func.func @transform_0(%arg0: i32) -> (i32, i32) {
    %c0_i32 = arith.constant 0 : i32
    %c0_i32_0 = arith.constant 0 : i32
    return %arg0, %c0_i32 : i32, i32
  }
  func.func @transform_1(%arg0: i32) -> (i32, i32) {
    %c0_i32 = arith.constant 0 : i32
    %c0_i32_0 = arith.constant 0 : i32
    %c0_i32_1 = arith.constant 0 : i32
    return %c0_i32, %c0_i32_0 : i32, i32
  }
  func.func @transform_2(%arg0: i32) -> (i32, i32) {
    %c0_i32 = arith.constant 0 : i32
    %c0_i32_0 = arith.constant 0 : i32
    return %arg0, %c0_i32 : i32, i32
  }
}

</mosaic_0001>

<llo_original>
// kernel: yolo_forward.3
$region0: #{yolo_forward.3}
  #allocation0 [shape = 'u32[]', space=smem, size = 0x4, offset = 0x4, fixed_abs, tag = 'smem constant byte address 0x4 - core index']
  #allocation1 [shape = 'u32[144,128]{1,0:T(1,128)}', space=vmem, size = 0x12000, scoped, tag = 'internal scratch']
  %s0 = inlined_call_operand.vmem [shape: bf16[512,16], index: 0, kind: input, shape index: {}]
  %s1 = inlined_call_operand.vmem [shape: f32[2,16], index: 1, kind: input, shape index: {}]
  %s2 = inlined_call_operand.vmem [shape: bf16[512,16], index: 2, kind: output, shape index: {}]
  %s3 = sld [smem:[#allocation0]]
  $region41: #{yolo_forward.3} parent=0
    _
  %s5 = ssub.s32 1, %s3
  %s6 = scalar_select 0, %s5, %s3
  loop: start=0, step=1, limit=4
  $region2: #{yolo_forward.3} parent=0 // loop_pre_header
    _
  $region3: #{yolo_forward.3} parent=0 // loop_header
    %s8 = sphi 0, %s12
    %p9 = scmp.ge.s32.totalorder %s8, 4
    %s18 = sphi 0, %s20
    %s21 = sphi 0, %s18
    %s22 = sphi 0, %s21
    %s38 = sphi 0, %s22
    %s42 = sphi 0, %s42
    %s44 = sphi 0, %s42
    %s45 = sphi 0, %s44
    %s59 = sphi 0, %s45
    %s65 = sphi 0, %s67
    %s68 = sphi 0, %s65
    %s69 = sphi 0, %s68
    %s85 = sphi 0, %s69
  $region4: #{yolo_forward.3} parent=0 // loop_header_branch
    %11 = sbr.rel (%p9) target = $region8
  $region5: #{yolo_forward.3} parent=0 // loop_body
    %s13 = ssub.s32 %s8, 1
    %s14 = ssub.s32 %s8, 2
    %s15 = sadd.s32 %s8, 1
    %s16 = ssub.s32 %s8, %s15
    %p17 = scmp.eq.s32.totalorder %s16, 0
    %s19 = sadd.s32 %s18, 1
    %s20 = scalar_select %p17, %s18, %s19
    %p23 = pneg %p17
    %p24 = scmp.eq.s32.totalorder %s8, 1
    %p25 = por %p23, %p24
    %p26 = scmp.ne.s32.totalorder %s18, %s21
    %p27 = scmp.eq.s32.totalorder %s8, 0
    %p28 = por %p26, %p27
    %p29 = scmp.ne.s32.totalorder %s18, %s21
    %p30 = scmp.eq.s32.totalorder %s13, 1
    %p31 = por %p29, %p30
    %p32 = scmp.ne.s32.totalorder %s21, %s22
    %p33 = scmp.eq.s32.totalorder %s13, 0
    %p34 = por %p32, %p33
    %p35 = scmp.ne.s32.totalorder %s21, %s22
    %p36 = scmp.eq.s32.totalorder %s14, 1
    %p37 = por %p35, %p36
    %p39 = scmp.ne.s32.totalorder %s22, %s38
    %p40 = scmp.eq.s32.totalorder %s14, 0
    %p41 = por %p39, %p40
    %s43 = sadd.s32 %s42, 1
    %p46 = scmp.eq.s32.totalorder %s8, 1
    %p47 = scmp.ne.s32.totalorder %s42, %s44
    %p48 = scmp.eq.s32.totalorder %s8, 0
    %p49 = por %p47, %p48
    %p50 = scmp.ne.s32.totalorder %s42, %s44
    %p51 = scmp.eq.s32.totalorder %s13, 1
    %p52 = por %p50, %p51
    %p53 = scmp.ne.s32.totalorder %s44, %s45
    %p54 = scmp.eq.s32.totalorder %s13, 0
    %p55 = por %p53, %p54
    %p56 = scmp.ne.s32.totalorder %s44, %s45
    %p57 = scmp.eq.s32.totalorder %s14, 1
    %p58 = por %p56, %p57
    %p60 = scmp.ne.s32.totalorder %s45, %s59
    %p61 = scmp.eq.s32.totalorder %s14, 0
    %p62 = por %p60, %p61
    %s63 = ssub.s32 %s8, %s15
    %p64 = scmp.eq.s32.totalorder %s63, 0
    %s66 = sadd.s32 %s65, 1
    %s67 = scalar_select %p64, %s65, %s66
    %p70 = pneg %p64
    %p71 = scmp.eq.s32.totalorder %s8, 1
    %p72 = por %p70, %p71
    %p73 = scmp.ne.s32.totalorder %s65, %s68
    %p74 = scmp.eq.s32.totalorder %s8, 0
    %p75 = por %p73, %p74
    %p76 = scmp.ne.s32.totalorder %s65, %s68
    %p77 = scmp.eq.s32.totalorder %s13, 1
    %p78 = por %p76, %p77
    %p79 = scmp.ne.s32.totalorder %s68, %s69
    %p80 = scmp.eq.s32.totalorder %s13, 0
    %p81 = por %p79, %p80
    %p82 = scmp.ne.s32.totalorder %s68, %s69
    %p83 = scmp.eq.s32.totalorder %s14, 1
    %p84 = por %p82, %p83
    %p86 = scmp.ne.s32.totalorder %s69, %s85
    %p87 = scmp.eq.s32.totalorder %s14, 0
    %p88 = por %p86, %p87
    %p89 = scmp.le.s32.totalorder 1, %s8
    %p90 = scmp.lt.s32.totalorder %s8, 3
    %p91 = pnand %p89, %p90
    %p92 = pneg %p91
    // Predicated region
    $region9: #{yolo_forward.3} parent=5 // pred_check
      _
    $region10: #{yolo_forward.3} parent=5 // pred_check_branch
      %94 = sbr.rel (%p91) target = $region12
    $region11: #{yolo_forward.3} parent=5 // pred_region
      %s95 = ssub.s32 %s8, 1
      // Predicated region
      $region13: #{yolo_forward.3} parent=11 // pred_check
        %p96 = pneg %p55
      $region14: #{yolo_forward.3} parent=11 // pred_check_branch
        %98 = sbr.rel (%p96) target = $region16
      $region15: #{yolo_forward.3} parent=11 // pred_region
        _
      $region16: #{yolo_forward.3} parent=11 // pred_fallthru
        _
    $region12: #{yolo_forward.3} parent=5 // pred_fallthru
      _
    %p99 = scmp.lt.s32.totalorder %s8, 2
    // Predicated region
    $region17: #{yolo_forward.3} parent=5 // pred_check
      %p100 = pneg %p99
    $region18: #{yolo_forward.3} parent=5 // pred_check_branch
      %102 = sbr.rel (%p100) target = $region20
    $region19: #{yolo_forward.3} parent=5 // pred_region
      // Predicated region
      $region21: #{yolo_forward.3} parent=19 // pred_check
        %p103 = pneg %p28
      $region22: #{yolo_forward.3} parent=19 // pred_check_branch
        %105 = sbr.rel (%p103) target = $region24
      $region23: #{yolo_forward.3} parent=19 // pred_region
        %s106 = smul.u32 32, %s8
        %p107 = scmp.lt.s32.totalorder %s106, 63
        %s108 = scalar_select %p107, %s106, 63
        %s109 = smul.addr %s108, 4
        %s110 = scalar_lea.vmem %s0, %s109
        %s111 = smul.u32 32, %s8
      $region24: #{yolo_forward.3} parent=19 // pred_fallthru
        _
    $region20: #{yolo_forward.3} parent=5 // pred_fallthru
      _
    %p112 = scmp.le.s32.totalorder 1, %s8
    %p113 = scmp.lt.s32.totalorder %s8, 3
    %p114 = pnand %p112, %p113
    %p115 = pneg %p114
    // Predicated region
    $region25: #{yolo_forward.3} parent=5 // pred_check
      _
    $region26: #{yolo_forward.3} parent=5 // pred_check_branch
      %117 = sbr.rel (%p114) target = $region28
    $region27: #{yolo_forward.3} parent=5 // pred_region
      %s118 = ssub.s32 %s8, 1
      %s119 = smul.u32 32, %s13
      %p120 = scmp.lt.s32.totalorder %s119, 63
      %s121 = scalar_select %p120, %s119, 63
      %s122 = smul.addr %s121, 4
      %s123 = scalar_lea.vmem %s0, %s122
      %p124 = pneg %p34
      %p125 = pneg %p31
      %p126 = pneg %p55
      %p127 = pneg %p52
      %p128 = pneg %p81
      %p129 = pneg %p78
      %s130 = smul.u32 32, %s13
      %p131 = scmp.lt.s32.totalorder %s130, 63
      %s132 = scalar_select %p131, %s130, 63
      %s133 = smul.addr %s132, 4
      %s134 = scalar_lea.vmem %s2, %s133
      %s135 = smul.u32 32, %s13
      %p136 = scmp.lt.s32.totalorder %s135, 63
      %s137 = scalar_select %p136, %s135, 63
      %s138 = smul.addr %s137, 4
      %s139 = scalar_lea.vmem %s0, %s138
      %s140 = smul.u32 32, %s13
      %s141 = smul.u32 32, %s13
      %p142 = scmp.lt.s32.totalorder %s141, 63
      %s143 = scalar_select %p142, %s141, 63
      %s144 = smul.addr %s143, 4
      %s145 = scalar_lea.vmem %s2, %s144
      %s146 = smul.u32 32, %s13
      %v147 = vld [vmem:[%s139] sm:$0xf]
      %v148 = vld [vmem:[%s139 + $0x4] sm:$0xf]
      %v149 = vld [vmem:[%s139 + $0x8] sm:$0xf]
      %v150 = vld [vmem:[%s139 + $0xc] sm:$0xf]
      %v151 = vld [vmem:[%s139 + $0x10] sm:$0xf]
      %v152 = vld [vmem:[%s139 + $0x14] sm:$0xf]
      %v153 = vld [vmem:[%s139 + $0x18] sm:$0xf]
      %v154 = vld [vmem:[%s139 + $0x1c] sm:$0xf]
      %v155 = vld [vmem:[%s139 + $0x20] sm:$0xf]
      %v156 = vld [vmem:[%s139 + $0x24] sm:$0xf]
      %v157 = vld [vmem:[%s139 + $0x28] sm:$0xf]
      %v158 = vld [vmem:[%s139 + $0x2c] sm:$0xf]
      %v159 = vld [vmem:[%s139 + $0x30] sm:$0xf]
      %v160 = vld [vmem:[%s139 + $0x34] sm:$0xf]
      %v161 = vld [vmem:[%s139 + $0x38] sm:$0xf]
      %v162 = vld [vmem:[%s139 + $0x3c] sm:$0xf]
      %v163 = vld [vmem:[%s139 + $0x40] sm:$0xf]
      %v164 = vld [vmem:[%s139 + $0x44] sm:$0xf]
      %v165 = vld [vmem:[%s139 + $0x48] sm:$0xf]
      %v166 = vld [vmem:[%s139 + $0x4c] sm:$0xf]
      %v167 = vld [vmem:[%s139 + $0x50] sm:$0xf]
      %v168 = vld [vmem:[%s139 + $0x54] sm:$0xf]
      %v169 = vld [vmem:[%s139 + $0x58] sm:$0xf]
      %v170 = vld [vmem:[%s139 + $0x5c] sm:$0xf]
      %v171 = vld [vmem:[%s139 + $0x60] sm:$0xf]
      %v172 = vld [vmem:[%s139 + $0x64] sm:$0xf]
      %v173 = vld [vmem:[%s139 + $0x68] sm:$0xf]
      %v174 = vld [vmem:[%s139 + $0x6c] sm:$0xf]
      %v175 = vld [vmem:[%s139 + $0x70] sm:$0xf]
      %v176 = vld [vmem:[%s139 + $0x74] sm:$0xf]
      %v177 = vld [vmem:[%s139 + $0x78] sm:$0xf]
      %v178 = vld [vmem:[%s139 + $0x7c] sm:$0xf]
      %v179 = vunpack.c.l.bf16 %v147
      %v180 = vunpack.c.l.bf16 %v148
      %v181 = vunpack.c.l.bf16 %v149
      %v182 = vunpack.c.l.bf16 %v150
      %v183 = vunpack.c.l.bf16 %v151
      %v184 = vunpack.c.l.bf16 %v152
      %v185 = vunpack.c.l.bf16 %v153
      %v186 = vunpack.c.l.bf16 %v154
      %v187 = vunpack.c.l.bf16 %v155
      %v188 = vunpack.c.l.bf16 %v156
      %v189 = vunpack.c.l.bf16 %v157
      %v190 = vunpack.c.l.bf16 %v158
      %v191 = vunpack.c.l.bf16 %v159
      %v192 = vunpack.c.l.bf16 %v160
      %v193 = vunpack.c.l.bf16 %v161
      %v194 = vunpack.c.l.bf16 %v162
      %v195 = vunpack.c.l.bf16 %v163
      %v196 = vunpack.c.l.bf16 %v164
      %v197 = vunpack.c.l.bf16 %v165
      %v198 = vunpack.c.l.bf16 %v166
      %v199 = vunpack.c.l.bf16 %v167
      %v200 = vunpack.c.l.bf16 %v168
      %v201 = vunpack.c.l.bf16 %v169
      %v202 = vunpack.c.l.bf16 %v170
      %v203 = vunpack.c.l.bf16 %v171
      %v204 = vunpack.c.l.bf16 %v172
      %v205 = vunpack.c.l.bf16 %v173
      %v206 = vunpack.c.l.bf16 %v174
      %v207 = vunpack.c.l.bf16 %v175
      %v208 = vunpack.c.l.bf16 %v176
      %v209 = vunpack.c.l.bf16 %v177
      %v210 = vunpack.c.l.bf16 %v178
      %v211 = vld [vmem:[%s1] sm:$0x1]
      %v212 = vld [vmem:[%s1 + $0x1] sm:$0x1]
      %v213 = vlaneseq
      %v214 = vshrl.u32 %v213, 7
      %v215 = vsub.s32 0, %v214
      %v216 = vrot.slane %v211, %v215
      %v217 = vmul.f32 %v179, %v216
      %v218 = vmul.f32 %v180, %v216
      %v219 = vmul.f32 %v181, %v216
      %v220 = vmul.f32 %v182, %v216
      %v221 = vmul.f32 %v183, %v216
      %v222 = vmul.f32 %v184, %v216
      %v223 = vmul.f32 %v185, %v216
      %v224 = vmul.f32 %v186, %v216
      %v225 = vmul.f32 %v187, %v216
      %v226 = vmul.f32 %v188, %v216
      %v227 = vmul.f32 %v189, %v216
      %v228 = vmul.f32 %v190, %v216
      %v229 = vmul.f32 %v191, %v216
      %v230 = vmul.f32 %v192, %v216
      %v231 = vmul.f32 %v193, %v216
      %v232 = vmul.f32 %v194, %v216
      %v233 = vmul.f32 %v195, %v216
      %v234 = vmul.f32 %v196, %v216
      %v235 = vmul.f32 %v197, %v216
      %v236 = vmul.f32 %v198, %v216
      %v237 = vmul.f32 %v199, %v216
      %v238 = vmul.f32 %v200, %v216
      %v239 = vmul.f32 %v201, %v216
      %v240 = vmul.f32 %v202, %v216
      %v241 = vmul.f32 %v203, %v216
      %v242 = vmul.f32 %v204, %v216
      %v243 = vmul.f32 %v205, %v216
      %v244 = vmul.f32 %v206, %v216
      %v245 = vmul.f32 %v207, %v216
      %v246 = vmul.f32 %v208, %v216
      %v247 = vmul.f32 %v209, %v216
      %v248 = vmul.f32 %v210, %v216
      %v249 = vlaneseq
      %v250 = vshrl.u32 %v249, 7
      %v251 = vsub.s32 0, %v250
      %v252 = vrot.slane %v212, %v251
      %v253 = vadd.f32 %v217, %v252
      %v254 = vadd.f32 %v218, %v252
      %v255 = vadd.f32 %v219, %v252
      %v256 = vadd.f32 %v220, %v252
      %v257 = vadd.f32 %v221, %v252
      %v258 = vadd.f32 %v222, %v252
      %v259 = vadd.f32 %v223, %v252
      %v260 = vadd.f32 %v224, %v252
      %v261 = vadd.f32 %v225, %v252
      %v262 = vadd.f32 %v226, %v252
      %v263 = vadd.f32 %v227, %v252
      %v264 = vadd.f32 %v228, %v252
      %v265 = vadd.f32 %v229, %v252
      %v266 = vadd.f32 %v230, %v252
      %v267 = vadd.f32 %v231, %v252
      %v268 = vadd.f32 %v232, %v252
      %v269 = vadd.f32 %v233, %v252
      %v270 = vadd.f32 %v234, %v252
      %v271 = vadd.f32 %v235, %v252
      %v272 = vadd.f32 %v236, %v252
      %v273 = vadd.f32 %v237, %v252
      %v274 = vadd.f32 %v238, %v252
      %v275 = vadd.f32 %v239, %v252
      %v276 = vadd.f32 %v240, %v252
      %v277 = vadd.f32 %v241, %v252
      %v278 = vadd.f32 %v242, %v252
      %v279 = vadd.f32 %v243, %v252
      %v280 = vadd.f32 %v244, %v252
      %v281 = vadd.f32 %v245, %v252
      %v282 = vadd.f32 %v246, %v252
      %v283 = vadd.f32 %v247, %v252
      %v284 = vadd.f32 %v248, %v252
      %v285 = vxor.u32 %v253, 2147483648
      %v286 = vxor.u32 %v254, 2147483648
      %v287 = vxor.u32 %v255, 2147483648
      %v288 = vxor.u32 %v256, 2147483648
      %v289 = vxor.u32 %v257, 2147483648
      %v290 = vxor.u32 %v258, 2147483648
      %v291 = vxor.u32 %v259, 2147483648
      %v292 = vxor.u32 %v260, 2147483648
      %v293 = vxor.u32 %v261, 2147483648
      %v294 = vxor.u32 %v262, 2147483648
      %v295 = vxor.u32 %v263, 2147483648
      %v296 = vxor.u32 %v264, 2147483648
      %v297 = vxor.u32 %v265, 2147483648
      %v298 = vxor.u32 %v266, 2147483648
      %v299 = vxor.u32 %v267, 2147483648
      %v300 = vxor.u32 %v268, 2147483648
      %v301 = vxor.u32 %v269, 2147483648
      %v302 = vxor.u32 %v270, 2147483648
      %v303 = vxor.u32 %v271, 2147483648
      %v304 = vxor.u32 %v272, 2147483648
      %v305 = vxor.u32 %v273, 2147483648
      %v306 = vxor.u32 %v274, 2147483648
      %v307 = vxor.u32 %v275, 2147483648
      %v308 = vxor.u32 %v276, 2147483648
      %v309 = vxor.u32 %v277, 2147483648
      %v310 = vxor.u32 %v278, 2147483648
      %v311 = vxor.u32 %v279, 2147483648
      %v312 = vxor.u32 %v280, 2147483648
      %v313 = vxor.u32 %v281, 2147483648
      %v314 = vxor.u32 %v282, 2147483648
      %v315 = vxor.u32 %v283, 2147483648
      %v316 = vxor.u32 %v284, 2147483648
      %v317 = vmul.f32 %v285, 1.442695
      %v318 = vpow.pop %v317
      %v319 = vmul.f32 %v286, 1.442695
      %v320 = vpow.pop %v319
      %v321 = vmul.f32 %v287, 1.442695
      %v322 = vpow.pop %v321
      %v323 = vmul.f32 %v288, 1.442695
      %v324 = vpow.pop %v323
      %v325 = vmul.f32 %v289, 1.442695
      %v326 = vpow.pop %v325
      %v327 = vmul.f32 %v290, 1.442695
      %v328 = vpow.pop %v327
      %v329 = vmul.f32 %v291, 1.442695
      %v330 = vpow.pop %v329
      %v331 = vmul.f32 %v292, 1.442695
      %v332 = vpow.pop %v331
      %v333 = vmul.f32 %v293, 1.442695
      %v334 = vpow.pop %v333
      %v335 = vmul.f32 %v294, 1.442695
      %v336 = vpow.pop %v335
      %v337 = vmul.f32 %v295, 1.442695
      %v338 = vpow.pop %v337
      %v339 = vmul.f32 %v296, 1.442695
      %v340 = vpow.pop %v339
      %v341 = vmul.f32 %v297, 1.442695
      %v342 = vpow.pop %v341
      %v343 = vmul.f32 %v298, 1.442695
      %v344 = vpow.pop %v343
      %v345 = vmul.f32 %v299, 1.442695
      %v346 = vpow.pop %v345
      %v347 = vmul.f32 %v300, 1.442695
      %v348 = vpow.pop %v347
      %v349 = vmul.f32 %v301, 1.442695
      %v350 = vpow.pop %v349
      %v351 = vmul.f32 %v302, 1.442695
      %v352 = vpow.pop %v351
      %v353 = vmul.f32 %v303, 1.442695
      %v354 = vpow.pop %v353
      %v355 = vmul.f32 %v304, 1.442695
      %v356 = vpow.pop %v355
      %v357 = vmul.f32 %v305, 1.442695
      %v358 = vpow.pop %v357
      %v359 = vmul.f32 %v306, 1.442695
      %v360 = vpow.pop %v359
      %v361 = vmul.f32 %v307, 1.442695
      %v362 = vpow.pop %v361
      %v363 = vmul.f32 %v308, 1.442695
      %v364 = vpow.pop %v363
      %v365 = vmul.f32 %v309, 1.442695
      %v366 = vpow.pop %v365
      %v367 = vmul.f32 %v310, 1.442695
      %v368 = vpow.pop %v367
      %v369 = vmul.f32 %v311, 1.442695
      %v370 = vpow.pop %v369
      %v371 = vmul.f32 %v312, 1.442695
      %v372 = vpow.pop %v371
      %v373 = vmul.f32 %v313, 1.442695
      %v374 = vpow.pop %v373
      %v375 = vmul.f32 %v314, 1.442695
      %v376 = vpow.pop %v375
      %v377 = vmul.f32 %v315, 1.442695
      %v378 = vpow.pop %v377
      %v379 = vmul.f32 %v316, 1.442695
      %v380 = vpow.pop %v379
      %v381 = vadd.f32 %v318, 1.0
      %v382 = vadd.f32 %v320, 1.0
      %v383 = vadd.f32 %v322, 1.0
      %v384 = vadd.f32 %v324, 1.0
      %v385 = vadd.f32 %v326, 1.0
      %v386 = vadd.f32 %v328, 1.0
      %v387 = vadd.f32 %v330, 1.0
      %v388 = vadd.f32 %v332, 1.0
      %v389 = vadd.f32 %v334, 1.0
      %v390 = vadd.f32 %v336, 1.0
      %v391 = vadd.f32 %v338, 1.0
      %v392 = vadd.f32 %v340, 1.0
      %v393 = vadd.f32 %v342, 1.0
      %v394 = vadd.f32 %v344, 1.0
      %v395 = vadd.f32 %v346, 1.0
      %v396 = vadd.f32 %v348, 1.0
      %v397 = vadd.f32 %v350, 1.0
      %v398 = vadd.f32 %v352, 1.0
      %v399 = vadd.f32 %v354, 1.0
      %v400 = vadd.f32 %v356, 1.0
      %v401 = vadd.f32 %v358, 1.0
      %v402 = vadd.f32 %v360, 1.0
      %v403 = vadd.f32 %v362, 1.0
      %v404 = vadd.f32 %v364, 1.0
      %v405 = vadd.f32 %v366, 1.0
      %v406 = vadd.f32 %v368, 1.0
      %v407 = vadd.f32 %v370, 1.0
      %v408 = vadd.f32 %v372, 1.0
      %v409 = vadd.f32 %v374, 1.0
      %v410 = vadd.f32 %v376, 1.0
      %v411 = vadd.f32 %v378, 1.0
      %v412 = vadd.f32 %v380, 1.0
      %v413 = vrcp.pop %v381
      %v414 = vmul.f32 1.0, %v413
      %v415 = vrcp.pop %v382
      %v416 = vmul.f32 1.0, %v415
      %v417 = vrcp.pop %v383
      %v418 = vmul.f32 1.0, %v417
      %v419 = vrcp.pop %v384
      %v420 = vmul.f32 1.0, %v419
      %v421 = vrcp.pop %v385
      %v422 = vmul.f32 1.0, %v421
      %v423 = vrcp.pop %v386
      %v424 = vmul.f32 1.0, %v423
      %v425 = vrcp.pop %v387
      %v426 = vmul.f32 1.0, %v425
      %v427 = vrcp.pop %v388
      %v428 = vmul.f32 1.0, %v427
      %v429 = vrcp.pop %v389
      %v430 = vmul.f32 1.0, %v429
      %v431 = vrcp.pop %v390
      %v432 = vmul.f32 1.0, %v431
      %v433 = vrcp.pop %v391
      %v434 = vmul.f32 1.0, %v433
      %v435 = vrcp.pop %v392
      %v436 = vmul.f32 1.0, %v435
      %v437 = vrcp.pop %v393
      %v438 = vmul.f32 1.0, %v437
      %v439 = vrcp.pop %v394
      %v440 = vmul.f32 1.0, %v439
      %v441 = vrcp.pop %v395
      %v442 = vmul.f32 1.0, %v441
      %v443 = vrcp.pop %v396
      %v444 = vmul.f32 1.0, %v443
      %v445 = vrcp.pop %v397
      %v446 = vmul.f32 1.0, %v445
      %v447 = vrcp.pop %v398
      %v448 = vmul.f32 1.0, %v447
      %v449 = vrcp.pop %v399
      %v450 = vmul.f32 1.0, %v449
      %v451 = vrcp.pop %v400
      %v452 = vmul.f32 1.0, %v451
      %v453 = vrcp.pop %v401
      %v454 = vmul.f32 1.0, %v453
      %v455 = vrcp.pop %v402
      %v456 = vmul.f32 1.0, %v455
      %v457 = vrcp.pop %v403
      %v458 = vmul.f32 1.0, %v457
      %v459 = vrcp.pop %v404
      %v460 = vmul.f32 1.0, %v459
      %v461 = vrcp.pop %v405
      %v462 = vmul.f32 1.0, %v461
      %v463 = vrcp.pop %v406
      %v464 = vmul.f32 1.0, %v463
      %v465 = vrcp.pop %v407
      %v466 = vmul.f32 1.0, %v465
      %v467 = vrcp.pop %v408
      %v468 = vmul.f32 1.0, %v467
      %v469 = vrcp.pop %v409
      %v470 = vmul.f32 1.0, %v469
      %v471 = vrcp.pop %v410
      %v472 = vmul.f32 1.0, %v471
      %v473 = vrcp.pop %v411
      %v474 = vmul.f32 1.0, %v473
      %v475 = vrcp.pop %v412
      %v476 = vmul.f32 1.0, %v475
      %v477 = vpack.c.bf16 %v416, %v414
      %v478 = vpack.c.bf16 %v420, %v418
      %v479 = vpack.c.bf16 %v424, %v422
      %v480 = vpack.c.bf16 %v428, %v426
      %v481 = vpack.c.bf16 %v432, %v430
      %v482 = vpack.c.bf16 %v436, %v434
      %v483 = vpack.c.bf16 %v440, %v438
      %v484 = vpack.c.bf16 %v444, %v442
      %v485 = vpack.c.bf16 %v448, %v446
      %v486 = vpack.c.bf16 %v452, %v450
      %v487 = vpack.c.bf16 %v456, %v454
      %v488 = vpack.c.bf16 %v460, %v458
      %v489 = vpack.c.bf16 %v464, %v462
      %v490 = vpack.c.bf16 %v468, %v466
      %v491 = vpack.c.bf16 %v472, %v470
      %v492 = vpack.c.bf16 %v476, %v474
      %v509 = vunpack.c.l.b16 %v477
      %v510 = vunpack.c.h.b16 %v477
      %v511 = vunpack.c.l.b16 %v478
      %v512 = vunpack.c.h.b16 %v478
      %v513 = vunpack.c.l.b16 %v479
      %v514 = vunpack.c.h.b16 %v479
      %v515 = vunpack.c.l.b16 %v480
      %v516 = vunpack.c.h.b16 %v480
      %v517 = vunpack.c.l.b16 %v481
      %v518 = vunpack.c.h.b16 %v481
      %v519 = vunpack.c.l.b16 %v482
      %v520 = vunpack.c.h.b16 %v482
      %v521 = vunpack.c.l.b16 %v483
      %v522 = vunpack.c.h.b16 %v483
      %v523 = vunpack.c.l.b16 %v484
      %v524 = vunpack.c.h.b16 %v484
      %v525 = vunpack.c.l.b16 %v485
      %v526 = vunpack.c.h.b16 %v485
      %v527 = vunpack.c.l.b16 %v486
      %v528 = vunpack.c.h.b16 %v486
      %v529 = vunpack.c.l.b16 %v487
      %v530 = vunpack.c.h.b16 %v487
      %v531 = vunpack.c.l.b16 %v488
      %v532 = vunpack.c.h.b16 %v488
      %v533 = vunpack.c.l.b16 %v489
      %v534 = vunpack.c.h.b16 %v489
      %v535 = vunpack.c.l.b16 %v490
      %v536 = vunpack.c.h.b16 %v490
      %v537 = vunpack.c.l.b16 %v491
      %v538 = vunpack.c.h.b16 %v491
      %v539 = vunpack.c.l.b16 %v492
      %v540 = vunpack.c.h.b16 %v492
      %v541 = vpack.c.b16 %v509, %v509
      %v542 = vpack.c.b16 %v510, %v510
      %v543 = vpack.c.b16 %v511, %v511
      %v544 = vpack.c.b16 %v512, %v512
      %v545 = vpack.c.b16 %v513, %v513
      %v546 = vpack.c.b16 %v514, %v514
      %v547 = vpack.c.b16 %v515, %v515
      %v548 = vpack.c.b16 %v516, %v516
      %v549 = vpack.c.b16 %v517, %v517
      %v550 = vpack.c.b16 %v518, %v518
      %v551 = vpack.c.b16 %v519, %v519
      %v552 = vpack.c.b16 %v520, %v520
      %v553 = vpack.c.b16 %v521, %v521
      %v554 = vpack.c.b16 %v522, %v522
      %v555 = vpack.c.b16 %v523, %v523
      %v556 = vpack.c.b16 %v524, %v524
      %v557 = vpack.c.b16 %v525, %v525
      %v558 = vpack.c.b16 %v526, %v526
      %v559 = vpack.c.b16 %v527, %v527
      %v560 = vpack.c.b16 %v528, %v528
      %v561 = vpack.c.b16 %v529, %v529
      %v562 = vpack.c.b16 %v530, %v530
      %v563 = vpack.c.b16 %v531, %v531
      %v564 = vpack.c.b16 %v532, %v532
      %v565 = vpack.c.b16 %v533, %v533
      %v566 = vpack.c.b16 %v534, %v534
      %v567 = vpack.c.b16 %v535, %v535
      %v568 = vpack.c.b16 %v536, %v536
      %v569 = vpack.c.b16 %v537, %v537
      %v570 = vpack.c.b16 %v538, %v538
      %v571 = vpack.c.b16 %v539, %v539
      %v572 = vpack.c.b16 %v540, %v540
      %vm605 = vcmask 125952
      %606 = vst.msk [vmem:[%s145] sm:$0xf] %vm605, %v541
      %607 = vst.msk [vmem:[%s145 + $0x4] sm:$0xf] %vm605, %v542
      %608 = vst.msk [vmem:[%s145 + $0x8] sm:$0xf] %vm605, %v543
      %609 = vst.msk [vmem:[%s145 + $0xc] sm:$0xf] %vm605, %v544
      %610 = vst.msk [vmem:[%s145 + $0x10] sm:$0xf] %vm605, %v545
      %611 = vst.msk [vmem:[%s145 + $0x14] sm:$0xf] %vm605, %v546
      %612 = vst.msk [vmem:[%s145 + $0x18] sm:$0xf] %vm605, %v547
      %613 = vst.msk [vmem:[%s145 + $0x1c] sm:$0xf] %vm605, %v548
      %614 = vst.msk [vmem:[%s145 + $0x20] sm:$0xf] %vm605, %v549
      %615 = vst.msk [vmem:[%s145 + $0x24] sm:$0xf] %vm605, %v550
      %616 = vst.msk [vmem:[%s145 + $0x28] sm:$0xf] %vm605, %v551
      %617 = vst.msk [vmem:[%s145 + $0x2c] sm:$0xf] %vm605, %v552
      %618 = vst.msk [vmem:[%s145 + $0x30] sm:$0xf] %vm605, %v553
      %619 = vst.msk [vmem:[%s145 + $0x34] sm:$0xf] %vm605, %v554
      %620 = vst.msk [vmem:[%s145 + $0x38] sm:$0xf] %vm605, %v555
      %621 = vst.msk [vmem:[%s145 + $0x3c] sm:$0xf] %vm605, %v556
      %622 = vst.msk [vmem:[%s145 + $0x40] sm:$0xf] %vm605, %v557
      %623 = vst.msk [vmem:[%s145 + $0x44] sm:$0xf] %vm605, %v558
      %624 = vst.msk [vmem:[%s145 + $0x48] sm:$0xf] %vm605, %v559
      %625 = vst.msk [vmem:[%s145 + $0x4c] sm:$0xf] %vm605, %v560
      %626 = vst.msk [vmem:[%s145 + $0x50] sm:$0xf] %vm605, %v561
      %627 = vst.msk [vmem:[%s145 + $0x54] sm:$0xf] %vm605, %v562
      %628 = vst.msk [vmem:[%s145 + $0x58] sm:$0xf] %vm605, %v563
      %629 = vst.msk [vmem:[%s145 + $0x5c] sm:$0xf] %vm605, %v564
      %630 = vst.msk [vmem:[%s145 + $0x60] sm:$0xf] %vm605, %v565
      %631 = vst.msk [vmem:[%s145 + $0x64] sm:$0xf] %vm605, %v566
      %632 = vst.msk [vmem:[%s145 + $0x68] sm:$0xf] %vm605, %v567
      %633 = vst.msk [vmem:[%s145 + $0x6c] sm:$0xf] %vm605, %v568
      %634 = vst.msk [vmem:[%s145 + $0x70] sm:$0xf] %vm605, %v569
      %635 = vst.msk [vmem:[%s145 + $0x74] sm:$0xf] %vm605, %v570
      %636 = vst.msk [vmem:[%s145 + $0x78] sm:$0xf] %vm605, %v571
      %637 = vst.msk [vmem:[%s145 + $0x7c] sm:$0xf] %vm605, %v572
      %s638 = smul.u32 32, %s13
      %p639 = scmp.lt.s32.totalorder %s638, 63
      %s640 = scalar_select %p639, %s638, 63
      %s641 = smul.addr %s640, 4
      %s642 = scalar_lea.vmem %s2, %s641
      // Predicated region
      $region29: #{yolo_forward.3} parent=27 // pred_check
        %p643 = pneg %p78
      $region30: #{yolo_forward.3} parent=27 // pred_check_branch
        %645 = sbr.rel (%p643) target = $region32
      $region31: #{yolo_forward.3} parent=27 // pred_region
        %s646 = smul.u32 32, %s13
      $region32: #{yolo_forward.3} parent=27 // pred_fallthru
        _
    $region28: #{yolo_forward.3} parent=5 // pred_fallthru
      _
    %p647 = scmp.le.s32.totalorder 2, %s8
    // Predicated region
    $region33: #{yolo_forward.3} parent=5 // pred_check
      %p648 = pneg %p647
    $region34: #{yolo_forward.3} parent=5 // pred_check_branch
      %650 = sbr.rel (%p648) target = $region36
    $region35: #{yolo_forward.3} parent=5 // pred_region
      %s651 = ssub.s32 %s8, 2
      // Predicated region
      $region37: #{yolo_forward.3} parent=35 // pred_check
        %p652 = pneg %p84
      $region38: #{yolo_forward.3} parent=35 // pred_check_branch
        %654 = sbr.rel (%p652) target = $region40
      $region39: #{yolo_forward.3} parent=35 // pred_region
        %s655 = smul.u32 32, %s14
        %p656 = scmp.lt.s32.totalorder %s655, 63
        %s657 = scalar_select %p656, %s655, 63
        %s658 = smul.addr %s657, 4
        %s659 = scalar_lea.vmem %s2, %s658
      $region40: #{yolo_forward.3} parent=35 // pred_fallthru
        _
    $region36: #{yolo_forward.3} parent=5 // pred_fallthru
      _
  $region6: #{yolo_forward.3} parent=0 // loop_footer
    %s12 = sadd.s32 1, %s8
  $region7: #{yolo_forward.3} parent=0 // loop_footer_branch
    %7 = sbr.rel target = $region3
  $region8: #{yolo_forward.3} parent=0 // loop_exit
    _

// kernel: yolo_forward.2
$region0: #{yolo_forward.2}
  #allocation0 [shape = 'u32[]', space=smem, size = 0x4, offset = 0x4, fixed_abs, tag = 'smem constant byte address 0x4 - core index']
  #allocation1 [shape = 'u32[144,128]{1,0:T(1,128)}', space=vmem, size = 0x12000, scoped, tag = 'internal scratch']
  %s0 = inlined_call_operand.vmem [shape: bf16[512,72], index: 0, kind: input, shape index: {}]
  %s1 = inlined_call_operand.vmem [shape: bf16[72,128], index: 1, kind: input, shape index: {}]
  %s2 = inlined_call_operand.vmem [shape: bf16[512,16], index: 2, kind: output, shape index: {0}]
  %s3 = inlined_call_operand.vmem [shape: f32[2,1,16], index: 3, kind: output, shape index: {1}]
  %s4 = inlined_call_operand.vmem [shape: f32[2,1,16], index: 4, kind: output, shape index: {2}]
  %5 = xla_tuple %s2, %s3, %s4
  %s6 = sld [smem:[#allocation0]]
  $region57: #{yolo_forward.2} parent=0
    _
  %s8 = ssub.s32 1, %s6
  %s9 = scalar_select 0, %s8, %s6
  loop: start=0, step=1, limit=4
  $region2: #{yolo_forward.2} parent=0 // loop_pre_header
    _
  $region3: #{yolo_forward.2} parent=0 // loop_header
    %s11 = sphi 0, %s15
    %p12 = scmp.ge.s32.totalorder %s11, 4
    %s21 = sphi 0, %s23
    %s24 = sphi 0, %s21
    %s25 = sphi 0, %s24
    %s41 = sphi 0, %s25
    %s45 = sphi 0, %s45
    %s47 = sphi 0, %s45
    %s48 = sphi 0, %s47
    %s62 = sphi 0, %s48
    %s68 = sphi 0, %s70
    %s71 = sphi 0, %s68
    %s72 = sphi 0, %s71
    %s88 = sphi 0, %s72
    %s94 = sphi 0, %s96
    %s97 = sphi 0, %s94
    %s98 = sphi 0, %s97
    %s114 = sphi 0, %s98
    %s120 = sphi 0, %s122
    %s123 = sphi 0, %s120
    %s124 = sphi 0, %s123
    %s140 = sphi 0, %s124
  $region4: #{yolo_forward.2} parent=0 // loop_header_branch
    %14 = sbr.rel (%p12) target = $region8
  $region5: #{yolo_forward.2} parent=0 // loop_body
    %s16 = ssub.s32 %s11, 1
    %s17 = ssub.s32 %s11, 2
    %s18 = sadd.s32 %s11, 1
    %s19 = ssub.s32 %s11, %s18
    %p20 = scmp.eq.s32.totalorder %s19, 0
    %s22 = sadd.s32 %s21, 1
    %s23 = scalar_select %p20, %s21, %s22
    %p26 = pneg %p20
    %p27 = scmp.eq.s32.totalorder %s11, 1
    %p28 = por %p26, %p27
    %p29 = scmp.ne.s32.totalorder %s21, %s24
    %p30 = scmp.eq.s32.totalorder %s11, 0
    %p31 = por %p29, %p30
    %p32 = scmp.ne.s32.totalorder %s21, %s24
    %p33 = scmp.eq.s32.totalorder %s16, 1
    %p34 = por %p32, %p33
    %p35 = scmp.ne.s32.totalorder %s24, %s25
    %p36 = scmp.eq.s32.totalorder %s16, 0
    %p37 = por %p35, %p36
    %p38 = scmp.ne.s32.totalorder %s24, %s25
    %p39 = scmp.eq.s32.totalorder %s17, 1
    %p40 = por %p38, %p39
    %p42 = scmp.ne.s32.totalorder %s25, %s41
    %p43 = scmp.eq.s32.totalorder %s17, 0
    %p44 = por %p42, %p43
    %s46 = sadd.s32 %s45, 1
    %p49 = scmp.eq.s32.totalorder %s11, 1
    %p50 = scmp.ne.s32.totalorder %s45, %s47
    %p51 = scmp.eq.s32.totalorder %s11, 0
    %p52 = por %p50, %p51
    %p53 = scmp.ne.s32.totalorder %s45, %s47
    %p54 = scmp.eq.s32.totalorder %s16, 1
    %p55 = por %p53, %p54
    %p56 = scmp.ne.s32.totalorder %s47, %s48
    %p57 = scmp.eq.s32.totalorder %s16, 0
    %p58 = por %p56, %p57
    %p59 = scmp.ne.s32.totalorder %s47, %s48
    %p60 = scmp.eq.s32.totalorder %s17, 1
    %p61 = por %p59, %p60
    %p63 = scmp.ne.s32.totalorder %s48, %s62
    %p64 = scmp.eq.s32.totalorder %s17, 0
    %p65 = por %p63, %p64
    %s66 = ssub.s32 %s11, %s18
    %p67 = scmp.eq.s32.totalorder %s66, 0
    %s69 = sadd.s32 %s68, 1
    %s70 = scalar_select %p67, %s68, %s69
    %p73 = pneg %p67
    %p74 = scmp.eq.s32.totalorder %s11, 1
    %p75 = por %p73, %p74
    %p76 = scmp.ne.s32.totalorder %s68, %s71
    %p77 = scmp.eq.s32.totalorder %s11, 0
    %p78 = por %p76, %p77
    %p79 = scmp.ne.s32.totalorder %s68, %s71
    %p80 = scmp.eq.s32.totalorder %s16, 1
    %p81 = por %p79, %p80
    %p82 = scmp.ne.s32.totalorder %s71, %s72
    %p83 = scmp.eq.s32.totalorder %s16, 0
    %p84 = por %p82, %p83
    %p85 = scmp.ne.s32.totalorder %s71, %s72
    %p86 = scmp.eq.s32.totalorder %s17, 1
    %p87 = por %p85, %p86
    %p89 = scmp.ne.s32.totalorder %s72, %s88
    %p90 = scmp.eq.s32.totalorder %s17, 0
    %p91 = por %p89, %p90
    %s92 = ssub.s32 %s11, %s18
    %p93 = scmp.eq.s32.totalorder %s92, 0
    %s95 = sadd.s32 %s94, 1
    %s96 = scalar_select %p93, %s94, %s95
    %p99 = pneg %p93
    %p100 = scmp.eq.s32.totalorder %s11, 1
    %p101 = por %p99, %p100
    %p102 = scmp.ne.s32.totalorder %s94, %s97
    %p103 = scmp.eq.s32.totalorder %s11, 0
    %p104 = por %p102, %p103
    %p105 = scmp.ne.s32.totalorder %s94, %s97
    %p106 = scmp.eq.s32.totalorder %s16, 1
    %p107 = por %p105, %p106
    %p108 = scmp.ne.s32.totalorder %s97, %s98
    %p109 = scmp.eq.s32.totalorder %s16, 0
    %p110 = por %p108, %p109
    %p111 = scmp.ne.s32.totalorder %s97, %s98
    %p112 = scmp.eq.s32.totalorder %s17, 1
    %p113 = por %p111, %p112
    %p115 = scmp.ne.s32.totalorder %s98, %s114
    %p116 = scmp.eq.s32.totalorder %s17, 0
    %p117 = por %p115, %p116
    %s118 = ssub.s32 %s11, %s18
    %p119 = scmp.eq.s32.totalorder %s118, 0
    %s121 = sadd.s32 %s120, 1
    %s122 = scalar_select %p119, %s120, %s121
    %p125 = pneg %p119
    %p126 = scmp.eq.s32.totalorder %s11, 1
    %p127 = por %p125, %p126
    %p128 = scmp.ne.s32.totalorder %s120, %s123
    %p129 = scmp.eq.s32.totalorder %s11, 0
    %p130 = por %p128, %p129
    %p131 = scmp.ne.s32.totalorder %s120, %s123
    %p132 = scmp.eq.s32.totalorder %s16, 1
    %p133 = por %p131, %p132
    %p134 = scmp.ne.s32.totalorder %s123, %s124
    %p135 = scmp.eq.s32.totalorder %s16, 0
    %p136 = por %p134, %p135
    %p137 = scmp.ne.s32.totalorder %s123, %s124
    %p138 = scmp.eq.s32.totalorder %s17, 1
    %p139 = por %p137, %p138
    %p141 = scmp.ne.s32.totalorder %s124, %s140
    %p142 = scmp.eq.s32.totalorder %s17, 0
    %p143 = por %p141, %p142
    %p144 = scmp.le.s32.totalorder 1, %s11
    %p145 = scmp.lt.s32.totalorder %s11, 3
    %p146 = pnand %p144, %p145
    %p147 = pneg %p146
    // Predicated region
    $region9: #{yolo_forward.2} parent=5 // pred_check
      _
    $region10: #{yolo_forward.2} parent=5 // pred_check_branch
      %149 = sbr.rel (%p146) target = $region12
    $region11: #{yolo_forward.2} parent=5 // pred_region
      %s150 = ssub.s32 %s11, 1
      // Predicated region
      $region13: #{yolo_forward.2} parent=11 // pred_check
        %p151 = pneg %p58
      $region14: #{yolo_forward.2} parent=11 // pred_check_branch
        %153 = sbr.rel (%p151) target = $region16
      $region15: #{yolo_forward.2} parent=11 // pred_region
        _
      $region16: #{yolo_forward.2} parent=11 // pred_fallthru
        _
    $region12: #{yolo_forward.2} parent=5 // pred_fallthru
      _
    %p154 = scmp.lt.s32.totalorder %s11, 2
    // Predicated region
    $region17: #{yolo_forward.2} parent=5 // pred_check
      %p155 = pneg %p154
    $region18: #{yolo_forward.2} parent=5 // pred_check_branch
      %157 = sbr.rel (%p155) target = $region20
    $region19: #{yolo_forward.2} parent=5 // pred_region
      // Predicated region
      $region21: #{yolo_forward.2} parent=19 // pred_check
        %p158 = pneg %p31
      $region22: #{yolo_forward.2} parent=19 // pred_check_branch
        %160 = sbr.rel (%p158) target = $region24
      $region23: #{yolo_forward.2} parent=19 // pred_region
        %s161 = smul.u32 32, %s11
        %p162 = scmp.lt.s32.totalorder %s161, 63
        %s163 = scalar_select %p162, %s161, 63
        %s164 = smul.addr %s163, 4
        %s165 = scalar_lea.vmem %s0, %s164
        %s166 = smul.u32 32, %s11
      $region24: #{yolo_forward.2} parent=19 // pred_fallthru
        _
    $region20: #{yolo_forward.2} parent=5 // pred_fallthru
      _
    %p167 = scmp.le.s32.totalorder 1, %s11
    %p168 = scmp.lt.s32.totalorder %s11, 3
    %p169 = pnand %p167, %p168
    %p170 = pneg %p169
    // Predicated region
    $region25: #{yolo_forward.2} parent=5 // pred_check
      _
    $region26: #{yolo_forward.2} parent=5 // pred_check_branch
      %172 = sbr.rel (%p169) target = $region28
    $region27: #{yolo_forward.2} parent=5 // pred_region
      %s173 = ssub.s32 %s11, 1
      %s174 = smul.u32 32, %s16
      %p175 = scmp.lt.s32.totalorder %s174, 63
      %s176 = scalar_select %p175, %s174, 63
      %s177 = smul.addr %s176, 4
      %s178 = scalar_lea.vmem %s0, %s177
      %p179 = pneg %p37
      %p180 = pneg %p34
      %p181 = pneg %p58
      %p182 = pneg %p55
      %p183 = pneg %p84
      %p184 = pneg %p81
      %s185 = smul.u32 32, %s16
      %p186 = scmp.lt.s32.totalorder %s185, 63
      %s187 = scalar_select %p186, %s185, 63
      %s188 = smul.addr %s187, 4
      %s189 = scalar_lea.vmem %s2, %s188
      %p190 = pneg %p110
      %p191 = pneg %p107
      %p192 = scmp.lt.s32.totalorder %s16, 1
      %s193 = scalar_select %p192, %s16, 1
      %s194 = scalar_lea.vmem %s3, %s193
      %p195 = pneg %p136
      %p196 = pneg %p133
      %p197 = scmp.lt.s32.totalorder %s16, 1
      %s198 = scalar_select %p197, %s16, 1
      %s199 = scalar_lea.vmem %s4, %s198
      %s200 = smul.u32 32, %s16
      %p201 = scmp.lt.s32.totalorder %s200, 63
      %s202 = scalar_select %p201, %s200, 63
      %s203 = smul.addr %s202, 4
      %s204 = scalar_lea.vmem %s0, %s203
      %s205 = smul.u32 32, %s16
      %s206 = smul.u32 32, %s16
      %p207 = scmp.lt.s32.totalorder %s206, 63
      %s208 = scalar_select %p207, %s206, 63
      %s209 = smul.addr %s208, 4
      %s210 = scalar_lea.vmem %s2, %s209
      %s211 = smul.u32 32, %s16
      %p212 = scmp.lt.s32.totalorder %s16, 1
      %s213 = scalar_select %p212, %s16, 1
      %s214 = scalar_lea.vmem %s3, %s213
      %p215 = scmp.lt.s32.totalorder %s16, 1
      %s216 = scalar_select %p215, %s16, 1
      %s217 = scalar_lea.vmem %s4, %s216
      %v219 = vld [vmem:[%s204] sm:$0xf]
      %v220 = vld [vmem:[%s204 + $0x4] sm:$0xf]
      %v221 = vld [vmem:[%s204 + $0x8] sm:$0xf]
      %v222 = vld [vmem:[%s204 + $0xc] sm:$0xf]
      %v223 = vld [vmem:[%s204 + $0x10] sm:$0xf]
      %v224 = vld [vmem:[%s204 + $0x14] sm:$0xf]
      %v225 = vld [vmem:[%s204 + $0x18] sm:$0xf]
      %v226 = vld [vmem:[%s204 + $0x1c] sm:$0xf]
      %v227 = vld [vmem:[%s204 + $0x20] sm:$0xf]
      %v228 = vld [vmem:[%s204 + $0x24] sm:$0xf]
      %v229 = vld [vmem:[%s204 + $0x28] sm:$0xf]
      %v230 = vld [vmem:[%s204 + $0x2c] sm:$0xf]
      %v231 = vld [vmem:[%s204 + $0x30] sm:$0xf]
      %v232 = vld [vmem:[%s204 + $0x34] sm:$0xf]
      %v233 = vld [vmem:[%s204 + $0x38] sm:$0xf]
      %v234 = vld [vmem:[%s204 + $0x3c] sm:$0xf]
      %v235 = vld [vmem:[%s204 + $0x40] sm:$0xf]
      %v236 = vld [vmem:[%s204 + $0x44] sm:$0xf]
      %v237 = vld [vmem:[%s204 + $0x48] sm:$0xf]
      %v238 = vld [vmem:[%s204 + $0x4c] sm:$0xf]
      %v239 = vld [vmem:[%s204 + $0x50] sm:$0xf]
      %v240 = vld [vmem:[%s204 + $0x54] sm:$0xf]
      %v241 = vld [vmem:[%s204 + $0x58] sm:$0xf]
      %v242 = vld [vmem:[%s204 + $0x5c] sm:$0xf]
      %v243 = vld [vmem:[%s204 + $0x60] sm:$0xf]
      %v244 = vld [vmem:[%s204 + $0x64] sm:$0xf]
      %v245 = vld [vmem:[%s204 + $0x68] sm:$0xf]
      %v246 = vld [vmem:[%s204 + $0x6c] sm:$0xf]
      %v247 = vld [vmem:[%s204 + $0x70] sm:$0xf]
      %v248 = vld [vmem:[%s204 + $0x74] sm:$0xf]
      %v249 = vld [vmem:[%s204 + $0x78] sm:$0xf]
      %v250 = vld [vmem:[%s204 + $0x7c] sm:$0xf]
      %v251 = vld [vmem:[%s1] sm:$0xf]
      %v252 = vld [vmem:[%s1 + $0x4] sm:$0xf]
      %v253 = vld [vmem:[%s1 + $0x8] sm:$0xf]
      %v254 = vld [vmem:[%s1 + $0xc] sm:$0xf]
      %v255 = vld [vmem:[%s1 + $0x10] sm:$0xf]
      %v256 = vld [vmem:[%s1 + $0x14] sm:$0xf]
      %v257 = vld [vmem:[%s1 + $0x18] sm:$0xf]
      %v258 = vld [vmem:[%s1 + $0x1c] sm:$0xf]
      %v259 = vld [vmem:[%s1 + $0x20] sm:$0xf]
      %v292 = vunpack.c.l.b16 %v219
      %v293 = vunpack.c.l.b16 %v220
      %v294 = vunpack.c.l.b16 %v221
      %v295 = vunpack.c.l.b16 %v222
      %v296 = vunpack.c.l.b16 %v223
      %v297 = vunpack.c.l.b16 %v224
      %v298 = vunpack.c.l.b16 %v225
      %v299 = vunpack.c.l.b16 %v226
      %v300 = vunpack.c.l.b16 %v227
      %v301 = vunpack.c.l.b16 %v228
      %v302 = vunpack.c.l.b16 %v229
      %v303 = vunpack.c.l.b16 %v230
      %v304 = vunpack.c.l.b16 %v231
      %v305 = vunpack.c.l.b16 %v232
      %v306 = vunpack.c.l.b16 %v233
      %v307 = vunpack.c.l.b16 %v234
      %v308 = vunpack.c.l.b16 %v235
      %v309 = vunpack.c.l.b16 %v236
      %v310 = vunpack.c.l.b16 %v237
      %v311 = vunpack.c.l.b16 %v238
      %v312 = vunpack.c.l.b16 %v239
      %v313 = vunpack.c.l.b16 %v240
      %v314 = vunpack.c.l.b16 %v241
      %v315 = vunpack.c.l.b16 %v242
      %v316 = vunpack.c.l.b16 %v243
      %v317 = vunpack.c.l.b16 %v244
      %v318 = vunpack.c.l.b16 %v245
      %v319 = vunpack.c.l.b16 %v246
      %v320 = vunpack.c.l.b16 %v247
      %v321 = vunpack.c.l.b16 %v248
      %v322 = vunpack.c.l.b16 %v249
      %v323 = vunpack.c.l.b16 %v250
      %v324 = vpack.c.b16 %v293, %v292
      %v325 = vpack.c.b16 %v295, %v294
      %v326 = vpack.c.b16 %v297, %v296
      %v327 = vpack.c.b16 %v299, %v298
      %v328 = vpack.c.b16 %v301, %v300
      %v329 = vpack.c.b16 %v303, %v302
      %v330 = vpack.c.b16 %v305, %v304
      %v331 = vpack.c.b16 %v307, %v306
      %v332 = vpack.c.b16 %v309, %v308
      %v333 = vpack.c.b16 %v311, %v310
      %v334 = vpack.c.b16 %v313, %v312
      %v335 = vpack.c.b16 %v315, %v314
      %v336 = vpack.c.b16 %v317, %v316
      %v337 = vpack.c.b16 %v319, %v318
      %v338 = vpack.c.b16 %v321, %v320
      %v339 = vpack.c.b16 %v323, %v322
      %v349 = vunpack.c.l.b16 %v251
      %v350 = vunpack.c.l.b16 %v252
      %v351 = vunpack.c.l.b16 %v253
      %v352 = vunpack.c.l.b16 %v254
      %v353 = vunpack.c.l.b16 %v255
      %v354 = vunpack.c.l.b16 %v256
      %v355 = vunpack.c.l.b16 %v257
      %v356 = vunpack.c.l.b16 %v258
      %v357 = vunpack.c.l.b16 %v259
      %v358 = vpack.c.b16 %v350, %v349
      %v359 = vpack.c.b16 %v352, %v351
      %v360 = vpack.c.b16 %v354, %v353
      %v361 = vpack.c.b16 %v356, %v355
      %v362 = vpack.c.b16 %v357, %v357
      %vm367 = vcmask 588800
      %v369 = vsel %vm367, %v324, 0
      %v372 = vsel %vm367, %v325, 0
      %v375 = vsel %vm367, %v326, 0
      %v378 = vsel %vm367, %v327, 0
      %v381 = vsel %vm367, %v328, 0
      %v384 = vsel %vm367, %v329, 0
      %v387 = vsel %vm367, %v330, 0
      %v390 = vsel %vm367, %v331, 0
      %v393 = vsel %vm367, %v332, 0
      %v396 = vsel %vm367, %v333, 0
      %v399 = vsel %vm367, %v334, 0
      %v402 = vsel %vm367, %v335, 0
      %v405 = vsel %vm367, %v336, 0
      %v408 = vsel %vm367, %v337, 0
      %v411 = vsel %vm367, %v338, 0
      %v414 = vsel %vm367, %v339, 0
      %vm416 = vcmask 1043456
      %v418 = vsel %vm416, %v362, 0
      %420 = vmatprep.subr.bf16.mxu0 0
      %421 = vmatpush1.bf16.msra.mxu0 %v358
      %422 = vmatprep.subr.bf16.mxu0 0
      %423 = vmatpush1.bf16.msra.mxu0 %v359
      %424 = vmatprep.subr.bf16.mxu0 0
      %425 = vmatpush1.bf16.msra.mxu0 %v360
      %426 = vmatprep.subr.bf16.mxu0 0
      %427 = vmatpush1.bf16.msra.mxu0 %v361
      %428 = vmatprep.subr.bf16.mxu0 0
      %429 = vmatpush1.bf16.msra.mxu0 %v418
      %430 = vmatprep.subr.bf16.mxu0 0
      %431 = vmatpush1.bf16.msra.mxu0 0
      %432 = vmatprep.subr.bf16.mxu0 0
      %433 = vmatpush1.bf16.msra.mxu0 0
      %434 = vmatprep.subr.bf16.mxu0 0
      %435 = vmatpush1.bf16.msra.mxu0 0
      %436 = vmatprep.subr.bf16.mxu0 0
      %437 = vmatpush1.bf16.msra.mxu0 0
      %438 = vmatprep.subr.bf16.mxu0 0
      %439 = vmatpush1.bf16.msra.mxu0 0
      %440 = vmatprep.subr.bf16.mxu0 0
      %441 = vmatpush1.bf16.msra.mxu0 0
      %442 = vmatprep.subr.bf16.mxu0 0
      %443 = vmatpush1.bf16.msra.mxu0 0
      %444 = vmatprep.subr.bf16.mxu0 0
      %445 = vmatpush1.bf16.msra.mxu0 0
      %446 = vmatprep.subr.bf16.mxu0 0
      %447 = vmatpush1.bf16.msra.mxu0 0
      %448 = vmatprep.subr.bf16.mxu0 0
      %449 = vmatpush1.bf16.msra.mxu0 0
      %450 = vmatprep.subr.bf16.mxu0 0
      %451 = vmatpush1.bf16.msra.mxu0 0
      %452 = vmatprep.mubr.bf16.mxu0 0
      %453 = vmatmul.mubr.bf16.gmra.mrb[0].mxu0 %v369
      %v454 = vpop.f32.mrb[0].mxu0
      %v455 = vadd.f32 0.0, %v454
      %v456 = vpop.f32.mrb[0].mxu0
      %v457 = vpop.f32.mrb[0].mxu0
      %v458 = vadd.f32 0.0, %v457
      %v459 = vpop.f32.mrb[0].mxu0
      %460 = vmatprep.mubr.bf16.mxu0 0
      %461 = vmatmul.mubr.bf16.gmra.mrb[0].mxu0 %v372
      %v462 = vpop.f32.mrb[0].mxu0
      %v463 = vadd.f32 0.0, %v462
      %v464 = vpop.f32.mrb[0].mxu0
      %v465 = vpop.f32.mrb[0].mxu0
      %v466 = vadd.f32 0.0, %v465
      %v467 = vpop.f32.mrb[0].mxu0
      %468 = vmatprep.mubr.bf16.mxu0 0
      %469 = vmatmul.mubr.bf16.gmra.mrb[0].mxu0 %v375
      %v470 = vpop.f32.mrb[0].mxu0
      %v471 = vadd.f32 0.0, %v470
      %v472 = vpop.f32.mrb[0].mxu0
      %v473 = vpop.f32.mrb[0].mxu0
      %v474 = vadd.f32 0.0, %v473
      %v475 = vpop.f32.mrb[0].mxu0
      %476 = vmatprep.mubr.bf16.mxu0 0
      %477 = vmatmul.mubr.bf16.gmra.mrb[0].mxu0 %v378
      %v478 = vpop.f32.mrb[0].mxu0
      %v479 = vadd.f32 0.0, %v478
      %v480 = vpop.f32.mrb[0].mxu0
      %v481 = vpop.f32.mrb[0].mxu0
      %v482 = vadd.f32 0.0, %v481
      %v483 = vpop.f32.mrb[0].mxu0
      %484 = vmatprep.mubr.bf16.mxu0 0
      %485 = vmatmul.mubr.bf16.gmra.mrb[0].mxu0 %v381
      %v486 = vpop.f32.mrb[0].mxu0
      %v487 = vadd.f32 0.0, %v486
      %v488 = vpop.f32.mrb[0].mxu0
      %v489 = vpop.f32.mrb[0].mxu0
      %v490 = vadd.f32 0.0, %v489
      %v491 = vpop.f32.mrb[0].mxu0
      %492 = vmatprep.mubr.bf16.mxu0 0
      %493 = vmatmul.mubr.bf16.gmra.mrb[0].mxu0 %v384
      %v494 = vpop.f32.mrb[0].mxu0
      %v495 = vadd.f32 0.0, %v494
      %v496 = vpop.f32.mrb[0].mxu0
      %v497 = vpop.f32.mrb[0].mxu0
      %v498 = vadd.f32 0.0, %v497
      %v499 = vpop.f32.mrb[0].mxu0
      %500 = vmatprep.mubr.bf16.mxu0 0
      %501 = vmatmul.mubr.bf16.gmra.mrb[0].mxu0 %v387
      %v502 = vpop.f32.mrb[0].mxu0
      %v503 = vadd.f32 0.0, %v502
      %v504 = vpop.f32.mrb[0].mxu0
      %v505 = vpop.f32.mrb[0].mxu0
      %v506 = vadd.f32 0.0, %v505
      %v507 = vpop.f32.mrb[0].mxu0
      %508 = vmatprep.mubr.bf16.mxu0 0
      %509 = vmatmul.mubr.bf16.gmra.mrb[0].mxu0 %v390
      %v510 = vpop.f32.mrb[0].mxu0
      %v511 = vadd.f32 0.0, %v510
      %v512 = vpop.f32.mrb[0].mxu0
      %v513 = vpop.f32.mrb[0].mxu0
      %v514 = vadd.f32 0.0, %v513
      %v515 = vpop.f32.mrb[0].mxu0
      %516 = vmatprep.mubr.bf16.mxu0 0
      %517 = vmatmul.mubr.bf16.gmra.mrb[0].mxu0 %v393
      %v518 = vpop.f32.mrb[0].mxu0
      %v519 = vadd.f32 0.0, %v518
      %v520 = vpop.f32.mrb[0].mxu0
      %v521 = vpop.f32.mrb[0].mxu0
      %v522 = vadd.f32 0.0, %v521
      %v523 = vpop.f32.mrb[0].mxu0
      %524 = vmatprep.mubr.bf16.mxu0 0
      %525 = vmatmul.mubr.bf16.gmra.mrb[0].mxu0 %v396
      %v526 = vpop.f32.mrb[0].mxu0
      %v527 = vadd.f32 0.0, %v526
      %v528 = vpop.f32.mrb[0].mxu0
      %v529 = vpop.f32.mrb[0].mxu0
      %v530 = vadd.f32 0.0, %v529
      %v531 = vpop.f32.mrb[0].mxu0
      %532 = vmatprep.mubr.bf16.mxu0 0
      %533 = vmatmul.mubr.bf16.gmra.mrb[0].mxu0 %v399
      %v534 = vpop.f32.mrb[0].mxu0
      %v535 = vadd.f32 0.0, %v534
      %v536 = vpop.f32.mrb[0].mxu0
      %v537 = vpop.f32.mrb[0].mxu0
      %v538 = vadd.f32 0.0, %v537
      %v539 = vpop.f32.mrb[0].mxu0
      %540 = vmatprep.mubr.bf16.mxu0 0
      %541 = vmatmul.mubr.bf16.gmra.mrb[0].mxu0 %v402
      %v542 = vpop.f32.mrb[0].mxu0
      %v543 = vadd.f32 0.0, %v542
      %v544 = vpop.f32.mrb[0].mxu0
      %v545 = vpop.f32.mrb[0].mxu0
      %v546 = vadd.f32 0.0, %v545
      %v547 = vpop.f32.mrb[0].mxu0
      %548 = vmatprep.mubr.bf16.mxu0 0
      %549 = vmatmul.mubr.bf16.gmra.mrb[0].mxu0 %v405
      %v550 = vpop.f32.mrb[0].mxu0
      %v551 = vadd.f32 0.0, %v550
      %v552 = vpop.f32.mrb[0].mxu0
      %v553 = vpop.f32.mrb[0].mxu0
      %v554 = vadd.f32 0.0, %v553
      %v555 = vpop.f32.mrb[0].mxu0
      %556 = vmatprep.mubr.bf16.mxu0 0
      %557 = vmatmul.mubr.bf16.gmra.mrb[0].mxu0 %v408
      %v558 = vpop.f32.mrb[0].mxu0
      %v559 = vadd.f32 0.0, %v558
      %v560 = vpop.f32.mrb[0].mxu0
      %v561 = vpop.f32.mrb[0].mxu0
      %v562 = vadd.f32 0.0, %v561
      %v563 = vpop.f32.mrb[0].mxu0
      %564 = vmatprep.mubr.bf16.mxu0 0
      %565 = vmatmul.mubr.bf16.gmra.mrb[0].mxu0 %v411
      %v566 = vpop.f32.mrb[0].mxu0
      %v567 = vadd.f32 0.0, %v566
      %v568 = vpop.f32.mrb[0].mxu0
      %v569 = vpop.f32.mrb[0].mxu0
      %v570 = vadd.f32 0.0, %v569
      %v571 = vpop.f32.mrb[0].mxu0
      %572 = vmatprep.mubr.bf16.mxu0 0
      %573 = vmatmul.mubr.bf16.gmra.mrb[0].mxu0 %v414
      %v574 = vpop.f32.mrb[0].mxu0
      %v575 = vadd.f32 0.0, %v574
      %v576 = vpop.f32.mrb[0].mxu0
      %v577 = vpop.f32.mrb[0].mxu0
      %v578 = vadd.f32 0.0, %v577
      %v579 = vpop.f32.mrb[0].mxu0
      %580 = vdwg.mxu0
      %v581 = vpack.c.bf16 %v458, %v455
      %v582 = vpack.c.bf16 %v466, %v463
      %v583 = vpack.c.bf16 %v474, %v471
      %v584 = vpack.c.bf16 %v482, %v479
      %v585 = vpack.c.bf16 %v490, %v487
      %v586 = vpack.c.bf16 %v498, %v495
      %v587 = vpack.c.bf16 %v506, %v503
      %v588 = vpack.c.bf16 %v514, %v511
      %v589 = vpack.c.bf16 %v522, %v519
      %v590 = vpack.c.bf16 %v530, %v527
      %v591 = vpack.c.bf16 %v538, %v535
      %v592 = vpack.c.bf16 %v546, %v543
      %v593 = vpack.c.bf16 %v554, %v551
      %v594 = vpack.c.bf16 %v562, %v559
      %v595 = vpack.c.bf16 %v570, %v567
      %v596 = vpack.c.bf16 %v578, %v575
      %v613 = vunpack.c.l.b16 %v581
      %v614 = vunpack.c.h.b16 %v581
      %v615 = vunpack.c.l.b16 %v582
      %v616 = vunpack.c.h.b16 %v582
      %v617 = vunpack.c.l.b16 %v583
      %v618 = vunpack.c.h.b16 %v583
      %v619 = vunpack.c.l.b16 %v584
      %v620 = vunpack.c.h.b16 %v584
      %v621 = vunpack.c.l.b16 %v585
      %v622 = vunpack.c.h.b16 %v585
      %v623 = vunpack.c.l.b16 %v586
      %v624 = vunpack.c.h.b16 %v586
      %v625 = vunpack.c.l.b16 %v587
      %v626 = vunpack.c.h.b16 %v587
      %v627 = vunpack.c.l.b16 %v588
      %v628 = vunpack.c.h.b16 %v588
      %v629 = vunpack.c.l.b16 %v589
      %v630 = vunpack.c.h.b16 %v589
      %v631 = vunpack.c.l.b16 %v590
      %v632 = vunpack.c.h.b16 %v590
      %v633 = vunpack.c.l.b16 %v591
      %v634 = vunpack.c.h.b16 %v591
      %v635 = vunpack.c.l.b16 %v592
      %v636 = vunpack.c.h.b16 %v592
      %v637 = vunpack.c.l.b16 %v593
      %v638 = vunpack.c.h.b16 %v593
      %v639 = vunpack.c.l.b16 %v594
      %v640 = vunpack.c.h.b16 %v594
      %v641 = vunpack.c.l.b16 %v595
      %v642 = vunpack.c.h.b16 %v595
      %v643 = vunpack.c.l.b16 %v596
      %v644 = vunpack.c.h.b16 %v596
      %v645 = vpack.c.b16 %v613, %v613
      %v646 = vpack.c.b16 %v614, %v614
      %v647 = vpack.c.b16 %v615, %v615
      %v648 = vpack.c.b16 %v616, %v616
      %v649 = vpack.c.b16 %v617, %v617
      %v650 = vpack.c.b16 %v618, %v618
      %v651 = vpack.c.b16 %v619, %v619
      %v652 = vpack.c.b16 %v620, %v620
      %v653 = vpack.c.b16 %v621, %v621
      %v654 = vpack.c.b16 %v622, %v622
      %v655 = vpack.c.b16 %v623, %v623
      %v656 = vpack.c.b16 %v624, %v624
      %v657 = vpack.c.b16 %v625, %v625
      %v658 = vpack.c.b16 %v626, %v626
      %v659 = vpack.c.b16 %v627, %v627
      %v660 = vpack.c.b16 %v628, %v628
      %v661 = vpack.c.b16 %v629, %v629
      %v662 = vpack.c.b16 %v630, %v630
      %v663 = vpack.c.b16 %v631, %v631
      %v664 = vpack.c.b16 %v632, %v632
      %v665 = vpack.c.b16 %v633, %v633
      %v666 = vpack.c.b16 %v634, %v634
      %v667 = vpack.c.b16 %v635, %v635
      %v668 = vpack.c.b16 %v636, %v636
      %v669 = vpack.c.b16 %v637, %v637
      %v670 = vpack.c.b16 %v638, %v638
      %v671 = vpack.c.b16 %v639, %v639
      %v672 = vpack.c.b16 %v640, %v640
      %v673 = vpack.c.b16 %v641, %v641
      %v674 = vpack.c.b16 %v642, %v642
      %v675 = vpack.c.b16 %v643, %v643
      %v676 = vpack.c.b16 %v644, %v644
      %vm709 = vcmask 125952
      %710 = vst.msk [vmem:[%s210] sm:$0xf] %vm709, %v645
      %711 = vst.msk [vmem:[%s210 + $0x4] sm:$0xf] %vm709, %v646
      %712 = vst.msk [vmem:[%s210 + $0x8] sm:$0xf] %vm709, %v647
      %713 = vst.msk [vmem:[%s210 + $0xc] sm:$0xf] %vm709, %v648
      %714 = vst.msk [vmem:[%s210 + $0x10] sm:$0xf] %vm709, %v649
      %715 = vst.msk [vmem:[%s210 + $0x14] sm:$0xf] %vm709, %v650
      %716 = vst.msk [vmem:[%s210 + $0x18] sm:$0xf] %vm709, %v651
      %717 = vst.msk [vmem:[%s210 + $0x1c] sm:$0xf] %vm709, %v652
      %718 = vst.msk [vmem:[%s210 + $0x20] sm:$0xf] %vm709, %v653
      %719 = vst.msk [vmem:[%s210 + $0x24] sm:$0xf] %vm709, %v654
      %720 = vst.msk [vmem:[%s210 + $0x28] sm:$0xf] %vm709, %v655
      %721 = vst.msk [vmem:[%s210 + $0x2c] sm:$0xf] %vm709, %v656
      %722 = vst.msk [vmem:[%s210 + $0x30] sm:$0xf] %vm709, %v657
      %723 = vst.msk [vmem:[%s210 + $0x34] sm:$0xf] %vm709, %v658
      %724 = vst.msk [vmem:[%s210 + $0x38] sm:$0xf] %vm709, %v659
      %725 = vst.msk [vmem:[%s210 + $0x3c] sm:$0xf] %vm709, %v660
      %726 = vst.msk [vmem:[%s210 + $0x40] sm:$0xf] %vm709, %v661
      %727 = vst.msk [vmem:[%s210 + $0x44] sm:$0xf] %vm709, %v662
      %728 = vst.msk [vmem:[%s210 + $0x48] sm:$0xf] %vm709, %v663
      %729 = vst.msk [vmem:[%s210 + $0x4c] sm:$0xf] %vm709, %v664
      %730 = vst.msk [vmem:[%s210 + $0x50] sm:$0xf] %vm709, %v665
      %731 = vst.msk [vmem:[%s210 + $0x54] sm:$0xf] %vm709, %v666
      %732 = vst.msk [vmem:[%s210 + $0x58] sm:$0xf] %vm709, %v667
      %733 = vst.msk [vmem:[%s210 + $0x5c] sm:$0xf] %vm709, %v668
      %734 = vst.msk [vmem:[%s210 + $0x60] sm:$0xf] %vm709, %v669
      %735 = vst.msk [vmem:[%s210 + $0x64] sm:$0xf] %vm709, %v670
      %736 = vst.msk [vmem:[%s210 + $0x68] sm:$0xf] %vm709, %v671
      %737 = vst.msk [vmem:[%s210 + $0x6c] sm:$0xf] %vm709, %v672
      %738 = vst.msk [vmem:[%s210 + $0x70] sm:$0xf] %vm709, %v673
      %739 = vst.msk [vmem:[%s210 + $0x74] sm:$0xf] %vm709, %v674
      %740 = vst.msk [vmem:[%s210 + $0x78] sm:$0xf] %vm709, %v675
      %741 = vst.msk [vmem:[%s210 + $0x7c] sm:$0xf] %vm709, %v676
      %vm742 = vcmask 130048
      %v743 = vsel %vm742, %v455, 0.0
      %v744 = vsel %vm742, %v458, 0.0
      %v745 = vadd.f32 %v743, %v744
      %v746 = vsel %vm742, %v463, 0.0
      %v747 = vadd.f32 %v745, %v746
      %v748 = vsel %vm742, %v466, 0.0
      %v749 = vadd.f32 %v747, %v748
      %v750 = vsel %vm742, %v471, 0.0
      %v751 = vadd.f32 %v749, %v750
      %v752 = vsel %vm742, %v474, 0.0
      %v753 = vadd.f32 %v751, %v752
      %v754 = vsel %vm742, %v479, 0.0
      %v755 = vadd.f32 %v753, %v754
      %v756 = vsel %vm742, %v482, 0.0
      %v757 = vadd.f32 %v755, %v756
      %v758 = vsel %vm742, %v487, 0.0
      %v759 = vadd.f32 %v757, %v758
      %v760 = vsel %vm742, %v490, 0.0
      %v761 = vadd.f32 %v759, %v760
      %v762 = vsel %vm742, %v495, 0.0
      %v763 = vadd.f32 %v761, %v762
      %v764 = vsel %vm742, %v498, 0.0
      %v765 = vadd.f32 %v763, %v764
      %v766 = vsel %vm742, %v503, 0.0
      %v767 = vadd.f32 %v765, %v766
      %v768 = vsel %vm742, %v506, 0.0
      %v769 = vadd.f32 %v767, %v768
      %v770 = vsel %vm742, %v511, 0.0
      %v771 = vadd.f32 %v769, %v770
      %v772 = vsel %vm742, %v514, 0.0
      %v773 = vadd.f32 %v771, %v772
      %v774 = vsel %vm742, %v519, 0.0
      %v775 = vadd.f32 %v773, %v774
      %v776 = vsel %vm742, %v522, 0.0
      %v777 = vadd.f32 %v775, %v776
      %v778 = vsel %vm742, %v527, 0.0
      %v779 = vadd.f32 %v777, %v778
      %v780 = vsel %vm742, %v530, 0.0
      %v781 = vadd.f32 %v779, %v780
      %v782 = vsel %vm742, %v535, 0.0
      %v783 = vadd.f32 %v781, %v782
      %v784 = vsel %vm742, %v538, 0.0
      %v785 = vadd.f32 %v783, %v784
      %v786 = vsel %vm742, %v543, 0.0
      %v787 = vadd.f32 %v785, %v786
      %v788 = vsel %vm742, %v546, 0.0
      %v789 = vadd.f32 %v787, %v788
      %v790 = vsel %vm742, %v551, 0.0
      %v791 = vadd.f32 %v789, %v790
      %v792 = vsel %vm742, %v554, 0.0
      %v793 = vadd.f32 %v791, %v792
      %v794 = vsel %vm742, %v559, 0.0
      %v795 = vadd.f32 %v793, %v794
      %v796 = vsel %vm742, %v562, 0.0
      %v797 = vadd.f32 %v795, %v796
      %v798 = vsel %vm742, %v567, 0.0
      %v799 = vadd.f32 %v797, %v798
      %v800 = vsel %vm742, %v570, 0.0
      %v801 = vadd.f32 %v799, %v800
      %v802 = vsel %vm742, %v575, 0.0
      %v803 = vadd.f32 %v801, %v802
      %v804 = vsel %vm742, %v578, 0.0
      %v805 = vadd.f32 %v803, %v804
      %v806 = vrot.slane %v805, 4
      %v807 = vadd.f32 %v805, %v806
      %v808 = vrot.slane %v807, 2
      %v809 = vadd.f32 %v807, %v808
      %v810 = vrot.slane %v809, 1
      %v811 = vadd.f32 %v809, %v810
      %vm812 = vcmask 122880
      %813 = vst.msk [vmem:[%s214] sm:$0x1] %vm812, %v811
      %v814 = vmul.f32 %v455, %v455
      %v815 = vmul.f32 %v458, %v458
      %v816 = vmul.f32 %v463, %v463
      %v817 = vmul.f32 %v466, %v466
      %v818 = vmul.f32 %v471, %v471
      %v819 = vmul.f32 %v474, %v474
      %v820 = vmul.f32 %v479, %v479
      %v821 = vmul.f32 %v482, %v482
      %v822 = vmul.f32 %v487, %v487
      %v823 = vmul.f32 %v490, %v490
      %v824 = vmul.f32 %v495, %v495
      %v825 = vmul.f32 %v498, %v498
      %v826 = vmul.f32 %v503, %v503
      %v827 = vmul.f32 %v506, %v506
      %v828 = vmul.f32 %v511, %v511
      %v829 = vmul.f32 %v514, %v514
      %v830 = vmul.f32 %v519, %v519
      %v831 = vmul.f32 %v522, %v522
      %v832 = vmul.f32 %v527, %v527
      %v833 = vmul.f32 %v530, %v530
      %v834 = vmul.f32 %v535, %v535
      %v835 = vmul.f32 %v538, %v538
      %v836 = vmul.f32 %v543, %v543
      %v837 = vmul.f32 %v546, %v546
      %v838 = vmul.f32 %v551, %v551
      %v839 = vmul.f32 %v554, %v554
      %v840 = vmul.f32 %v559, %v559
      %v841 = vmul.f32 %v562, %v562
      %v842 = vmul.f32 %v567, %v567
      %v843 = vmul.f32 %v570, %v570
      %v844 = vmul.f32 %v575, %v575
      %v845 = vmul.f32 %v578, %v578
      %v846 = vsel %vm742, %v814, 0.0
      %v847 = vsel %vm742, %v815, 0.0
      %v848 = vadd.f32 %v846, %v847
      %v849 = vsel %vm742, %v816, 0.0
      %v850 = vadd.f32 %v848, %v849
      %v851 = vsel %vm742, %v817, 0.0
      %v852 = vadd.f32 %v850, %v851
      %v853 = vsel %vm742, %v818, 0.0
      %v854 = vadd.f32 %v852, %v853
      %v855 = vsel %vm742, %v819, 0.0
      %v856 = vadd.f32 %v854, %v855
      %v857 = vsel %vm742, %v820, 0.0
      %v858 = vadd.f32 %v856, %v857
      %v859 = vsel %vm742, %v821, 0.0
      %v860 = vadd.f32 %v858, %v859
      %v861 = vsel %vm742, %v822, 0.0
      %v862 = vadd.f32 %v860, %v861
      %v863 = vsel %vm742, %v823, 0.0
      %v864 = vadd.f32 %v862, %v863
      %v865 = vsel %vm742, %v824, 0.0
      %v866 = vadd.f32 %v864, %v865
      %v867 = vsel %vm742, %v825, 0.0
      %v868 = vadd.f32 %v866, %v867
      %v869 = vsel %vm742, %v826, 0.0
      %v870 = vadd.f32 %v868, %v869
      %v871 = vsel %vm742, %v827, 0.0
      %v872 = vadd.f32 %v870, %v871
      %v873 = vsel %vm742, %v828, 0.0
      %v874 = vadd.f32 %v872, %v873
      %v875 = vsel %vm742, %v829, 0.0
      %v876 = vadd.f32 %v874, %v875
      %v877 = vsel %vm742, %v830, 0.0
      %v878 = vadd.f32 %v876, %v877
      %v879 = vsel %vm742, %v831, 0.0
      %v880 = vadd.f32 %v878, %v879
      %v881 = vsel %vm742, %v832, 0.0
      %v882 = vadd.f32 %v880, %v881
      %v883 = vsel %vm742, %v833, 0.0
      %v884 = vadd.f32 %v882, %v883
      %v885 = vsel %vm742, %v834, 0.0
      %v886 = vadd.f32 %v884, %v885
      %v887 = vsel %vm742, %v835, 0.0
      %v888 = vadd.f32 %v886, %v887
      %v889 = vsel %vm742, %v836, 0.0
      %v890 = vadd.f32 %v888, %v889
      %v891 = vsel %vm742, %v837, 0.0
      %v892 = vadd.f32 %v890, %v891
      %v893 = vsel %vm742, %v838, 0.0
      %v894 = vadd.f32 %v892, %v893
      %v895 = vsel %vm742, %v839, 0.0
      %v896 = vadd.f32 %v894, %v895
      %v897 = vsel %vm742, %v840, 0.0
      %v898 = vadd.f32 %v896, %v897
      %v899 = vsel %vm742, %v841, 0.0
      %v900 = vadd.f32 %v898, %v899
      %v901 = vsel %vm742, %v842, 0.0
      %v902 = vadd.f32 %v900, %v901
      %v903 = vsel %vm742, %v843, 0.0
      %v904 = vadd.f32 %v902, %v903
      %v905 = vsel %vm742, %v844, 0.0
      %v906 = vadd.f32 %v904, %v905
      %v907 = vsel %vm742, %v845, 0.0
      %v908 = vadd.f32 %v906, %v907
      %v909 = vrot.slane %v908, 4
      %v910 = vadd.f32 %v908, %v909
      %v911 = vrot.slane %v910, 2
      %v912 = vadd.f32 %v910, %v911
      %v913 = vrot.slane %v912, 1
      %v914 = vadd.f32 %v912, %v913
      %915 = vst.msk [vmem:[%s217] sm:$0x1] %vm812, %v914
      %s916 = smul.u32 32, %s16
      %p917 = scmp.lt.s32.totalorder %s916, 63
      %s918 = scalar_select %p917, %s916, 63
      %s919 = smul.addr %s918, 4
      %s920 = scalar_lea.vmem %s2, %s919
      %p921 = scmp.lt.s32.totalorder %s16, 1
      %s922 = scalar_select %p921, %s16, 1
      %s923 = scalar_lea.vmem %s3, %s922
      %p924 = scmp.lt.s32.totalorder %s16, 1
      %s925 = scalar_select %p924, %s16, 1
      %s926 = scalar_lea.vmem %s4, %s925
      // Predicated region
      $region29: #{yolo_forward.2} parent=27 // pred_check
        %p927 = pneg %p81
      $region30: #{yolo_forward.2} parent=27 // pred_check_branch
        %929 = sbr.rel (%p927) target = $region32
      $region31: #{yolo_forward.2} parent=27 // pred_region
        %s930 = smul.u32 32, %s16
      $region32: #{yolo_forward.2} parent=27 // pred_fallthru
        _
      // Predicated region
      $region33: #{yolo_forward.2} parent=27 // pred_check
        %p931 = pneg %p107
      $region34: #{yolo_forward.2} parent=27 // pred_check_branch
        %933 = sbr.rel (%p931) target = $region36
      $region35: #{yolo_forward.2} parent=27 // pred_region
        _
      $region36: #{yolo_forward.2} parent=27 // pred_fallthru
        _
      // Predicated region
      $region37: #{yolo_forward.2} parent=27 // pred_check
        %p934 = pneg %p133
      $region38: #{yolo_forward.2} parent=27 // pred_check_branch
        %936 = sbr.rel (%p934) target = $region40
      $region39: #{yolo_forward.2} parent=27 // pred_region
        _
      $region40: #{yolo_forward.2} parent=27 // pred_fallthru
        _
    $region28: #{yolo_forward.2} parent=5 // pred_fallthru
      _
    %p937 = scmp.le.s32.totalorder 2, %s11
    // Predicated region
    $region41: #{yolo_forward.2} parent=5 // pred_check
      %p938 = pneg %p937
    $region42: #{yolo_forward.2} parent=5 // pred_check_branch
      %940 = sbr.rel (%p938) target = $region44
    $region43: #{yolo_forward.2} parent=5 // pred_region
      %s941 = ssub.s32 %s11, 2
      // Predicated region
      $region45: #{yolo_forward.2} parent=43 // pred_check
        %p942 = pneg %p87
      $region46: #{yolo_forward.2} parent=43 // pred_check_branch
        %944 = sbr.rel (%p942) target = $region48
      $region47: #{yolo_forward.2} parent=43 // pred_region
        %s945 = smul.u32 32, %s17
        %p946 = scmp.lt.s32.totalorder %s945, 63
        %s947 = scalar_select %p946, %s945, 63
        %s948 = smul.addr %s947, 4
        %s949 = scalar_lea.vmem %s2, %s948
      $region48: #{yolo_forward.2} parent=43 // pred_fallthru
        _
      // Predicated region
      $region49: #{yolo_forward.2} parent=43 // pred_check
        %p950 = pneg %p113
      $region50: #{yolo_forward.2} parent=43 // pred_check_branch
        %952 = sbr.rel (%p950) target = $region52
      $region51: #{yolo_forward.2} parent=43 // pred_region
        %p953 = scmp.lt.s32.totalorder %s17, 1
        %s954 = scalar_select %p953, %s17, 1
        %s955 = scalar_lea.vmem %s3, %s954
      $region52: #{yolo_forward.2} parent=43 // pred_fallthru
        _
      // Predicated region
      $region53: #{yolo_forward.2} parent=43 // pred_check
        %p956 = pneg %p139
      $region54: #{yolo_forward.2} parent=43 // pred_check_branch
        %958 = sbr.rel (%p956) target = $region56
      $region55: #{yolo_forward.2} parent=43 // pred_region
        %p959 = scmp.lt.s32.totalorder %s17, 1
        %s960 = scalar_select %p959, %s17, 1
        %s961 = scalar_lea.vmem %s4, %s960
      $region56: #{yolo_forward.2} parent=43 // pred_fallthru
        _
    $region44: #{yolo_forward.2} parent=5 // pred_fallthru
      _
  $region6: #{yolo_forward.2} parent=0 // loop_footer
    %s15 = sadd.s32 1, %s11
  $region7: #{yolo_forward.2} parent=0 // loop_footer_branch
    %10 = sbr.rel target = $region3
  $region8: #{yolo_forward.2} parent=0 // loop_exit
    _

</llo_original>
